<compile_context>
chip_gen: v6e
topology: v6e:2x2x1
jax: 0.10.0
libtpu: 0.0.40
codegen_flags: <defaults>
</compile_context>

<pallas_src>
import jax
import jax.numpy as jnp
from jax.experimental import pallas as pl
from jax.experimental.pallas import tpu as pltpu

EPS = 1e-5  # PyTorch BatchNorm3d default eps


def _round_up(x, m):
    return ((x + m - 1) // m) * m


# --------------------------- Pallas kernels ---------------------------------

def _stats_kernel(a_ref, w_ref, sum_ref, sq_ref, acc_ref):
    """Pass 1: conv GEMM (bf16 x bf16 -> f32 acc) + per-tile BN partial sums only."""
    @pl.when(pl.program_id(1) == 0)
    def _():
        acc_ref[...] = jnp.zeros_like(acc_ref)

    acc_ref[...] += jnp.dot(a_ref[...], w_ref[...],
                            preferred_element_type=jnp.float32)

    @pl.when(pl.program_id(1) == pl.num_programs(1) - 1)
    def _():
        y = acc_ref[...]
        sum_ref[...] = jnp.sum(y, axis=0)[None, None, :]
        sq_ref[...] = jnp.sum(y * y, axis=0)[None, None, :]


def _gemm_bn_kernel(a_ref, w_ref, scale_ref, shift_ref, o_ref, acc_ref):
    """Pass 2: recompute tile GEMM, write out = y*scale + shift sliced to Cout."""
    @pl.when(pl.program_id(1) == 0)
    def _():
        acc_ref[...] = jnp.zeros_like(acc_ref)

    acc_ref[...] += jnp.dot(a_ref[...], w_ref[...],
                            preferred_element_type=jnp.float32)

    @pl.when(pl.program_id(1) == pl.num_programs(1) - 1)
    def _():
        cout = o_ref.shape[-1]
        y = acc_ref[...][:, :cout]
        o_ref[...] = (y * scale_ref[...] + shift_ref[...]).astype(o_ref.dtype)


# --------------------------- plain-JAX glue ----------------------------------

def _im2col_3d(x_ncdhw, ksize, stride, pad, dtype):
    """Pad + channels-last + patch extraction; emits A in `dtype` (bf16 halves HBM)."""
    N, Cin, D, H, W = x_ncdhw.shape
    Do = (D + 2 * pad - ksize) // stride + 1
    Ho = (H + 2 * pad - ksize) // stride + 1
    Wo = (W + 2 * pad - ksize) // stride + 1
    xp = jnp.pad(x_ncdhw, ((0, 0), (0, 0), (pad, pad), (pad, pad), (pad, pad)))
    xp = jnp.transpose(xp, (0, 2, 3, 4, 1)).astype(dtype)   # (N,Dp,Hp,Wp,Cin) bf16
    cols = []
    for kd in range(ksize):
        for kh in range(ksize):
            for kw in range(ksize):
                cols.append(xp[:, kd:kd + stride * Do:stride,
                                  kh:kh + stride * Ho:stride,
                                  kw:kw + stride * Wo:stride, :])
    patches = jnp.stack(cols, axis=-2)                       # (N,Do,Ho,Wo,k^3,Cin)
    A = patches.reshape(N * Do * Ho * Wo, ksize ** 3 * Cin)
    return A, (N, Do, Ho, Wo)


def conv_bn_3d(x, weight, gamma, beta, *, ksize=3, stride=1, pad=1, eps=EPS):
    """ConvBn3D.forward: bn(conv(x)).
    x: (N, Cin, D, H, W)  weight: (Cout, Cin, k, k, k)  gamma/beta: (Cout,)
    returns (N, Cout, Do, Ho, Wo) in PyTorch NCDHW convention (f32)."""
    Cout = weight.shape[0]
    # TODO(synk): biggest remaining HBM win is in-kernel tap accumulation (grid
    # over output-spatial tiles, halo-DMA'd channels-last input, k^3 MXU
    # accumulations) instead of materializing the k^3-expanded im2col matrix;
    # mitigated here by storing A in bfloat16.
    A, (N, Do, Ho, Wo) = _im2col_3d(x, ksize, stride, pad, jnp.bfloat16)
    M, K = A.shape

    # ---- lane/sublane-friendly padding & tile sizing ----
    Cp = _round_up(Cout, 128)          # GEMM / accumulator width (lane-dense MXU)
    Kp = _round_up(K, 128)
    TK = min(Kp, 512)                  # K grid axis keeps VMEM bounded for large Cin
    Kp = _round_up(Kp, TK)
    n_k = Kp // TK

    # TM from an explicit VMEM budget (v7x: 64 MiB physical, ~half per TensorCore;
    # v5e: 16 MiB default scoped limit, raised below via vmem_limit_bytes).
    VMEM_BUDGET = 20 * 1024 * 1024
    w_bytes = 2 * TK * Cp * 2                       # double-buffered bf16 weights
    per_row = 4 * TK + 4 * Cp + 8 * Cout            # A (2x bf16) + f32 acc + out (2x f32)
    tm_fit = max(16, ((VMEM_BUDGET - w_bytes) // per_row) // 16 * 16)
    TM = min(512, tm_fit)                           # ~512 rows already near HBM roofline
    if M < TM:
        TM = max(16, _round_up(M, 16))              # bf16 min tile is (16, 128)
    n_m = -(-M // TM)
    if n_m > 1 and n_m % 2 == 1:
        n_m += 1                                    # keep v7x's two TensorCores balanced
    Mp = n_m * TM

    A_p = jnp.pad(A, ((0, Mp - M), (0, Kp - K)))
    # (Cout,Cin,kd,kh,kw) -> (kd,kh,kw,Cin,Cout) -> (K,Cout); matches im2col column order.
    Wmat = jnp.transpose(weight, (2, 3, 4, 1, 0)).reshape(K, Cout).astype(jnp.bfloat16)
    W_p = jnp.pad(Wmat, ((0, Kp - K), (0, Cp - Cout)))

    cparams = pltpu.CompilerParams(
        dimension_semantics=("parallel", "arbitrary"),
        vmem_limit_bytes=32 * 1024 * 1024,
    )

    # NOTE: when n_k == 1 the weight block is grid-invariant; pipeline_mode=
    # pl.Buffered(1) would halve its VMEM footprint (left at the default here
    # for lowering compatibility — it is tiny at these sizes).

    # ---- pass 1: stats only (no y intermediate written to HBM) ----
    part_sum, part_sq = pl.pallas_call(
        _stats_kernel,
        out_shape=(
            jax.ShapeDtypeStruct((n_m, 1, Cp), jnp.float32),
            jax.ShapeDtypeStruct((n_m, 1, Cp), jnp.float32),
        ),
        grid=(n_m, n_k),
        in_specs=[
            pl.BlockSpec((TM, TK), lambda i, k: (i, k)),
            pl.BlockSpec((TK, Cp), lambda i, k: (k, 0)),
        ],
        out_specs=(
            pl.BlockSpec((1, 1, Cp), lambda i, k: (i, 0, 0)),
            pl.BlockSpec((1, 1, Cp), lambda i, k: (i, 0, 0)),
        ),
        scratch_shapes=[pltpu.VMEM((TM, Cp), jnp.float32)],
        compiler_params=cparams,
    )(A_p, W_p)

    # ---- tiny (Cout,)-sized stats finalize in plain JAX ----
    # Zero-padded rows / K-columns / channels contribute 0 to both sums, so
    # dividing by the true M keeps the statistics exact (f32 accumulation).
    s = jnp.sum(part_sum[:, 0, :Cout], axis=0)
    sq = jnp.sum(part_sq[:, 0, :Cout], axis=0)
    mean = s / M
    # TODO(synk): single-pass var = E[y^2]-mean^2 can cancel when |mean| >> std;
    # switch to per-tile centered (Welford) combination if that regime matters.
    var = jnp.maximum(sq / M - mean * mean, 0.0)
    scale = gamma.astype(jnp.float32) * jax.lax.rsqrt(var + eps)
    shift = beta.astype(jnp.float32) - mean * scale
    scale_p = scale.reshape(1, Cout)
    shift_p = shift.reshape(1, Cout)

    # ---- pass 2: recompute GEMM + fused normalize, compact Cout-wide output ----
    out_p = pl.pallas_call(
        _gemm_bn_kernel,
        out_shape=jax.ShapeDtypeStruct((Mp, Cout), jnp.float32),
        grid=(n_m, n_k),
        in_specs=[
            pl.BlockSpec((TM, TK), lambda i, k: (i, k)),
            pl.BlockSpec((TK, Cp), lambda i, k: (k, 0)),
            pl.BlockSpec((1, Cout), lambda i, k: (0, 0)),
            pl.BlockSpec((1, Cout), lambda i, k: (0, 0)),
        ],
        out_specs=pl.BlockSpec((TM, Cout), lambda i, k: (i, 0)),
        scratch_shapes=[pltpu.VMEM((TM, Cp), jnp.float32)],
        compiler_params=cparams,
    )(A_p, W_p, scale_p, shift_p)

    out = out_p[:M].reshape(N, Do, Ho, Wo, Cout)
    # NCDHW to match the PyTorch module; channels-last (NDHWC) consumers should
    # skip this permute — it is at least done on the compact Cout-wide tensor now.
    return jnp.transpose(out, (0, 4, 1, 2, 3))


def _reference(x, weight, gamma, beta):
    """Pure-JAX reference (Conv3d + training-mode BatchNorm3d) for validation."""
    y = jax.lax.conv_general_dilated(
        x, weight, window_strides=(1, 1, 1),
        padding=((1, 1), (1, 1), (1, 1)),
        dimension_numbers=("NCDHW", "OIDHW", "NCDHW"),
        precision=jax.lax.Precision.HIGHEST)
    mean = jnp.mean(y, axis=(0, 2, 3, 4), keepdims=True)
    var = jnp.mean((y - mean) ** 2, axis=(0, 2, 3, 4), keepdims=True)
    g = gamma.reshape(1, -1, 1, 1, 1)
    b = beta.reshape(1, -1, 1, 1, 1)
    return (y - mean) * jax.lax.rsqrt(var + EPS) * g + b


if __name__ == "__main__":
    # TODO(synk): BatchNorm running_mean/running_var buffer updates (training-mode
    # side effect) are not modeled; only the forward output is produced.
    key = jax.random.PRNGKey(0)
    k1, k2, k3, k4 = jax.random.split(key, 4)

    N, Cin, Cout, D, H, W = 2, 4, 8, 8, 8, 8
    x = jax.random.normal(k1, (N, Cin, D, H, W), dtype=jnp.float32)
    # Deterministic synthetic parameters (shapes from nn.Conv3d / nn.BatchNorm3d).
    weight = jax.random.normal(k2, (Cout, Cin, 3, 3, 3), dtype=jnp.float32) / jnp.sqrt(
        jnp.float32(Cin * 27))
    gamma = 1.0 + 0.1 * jax.random.normal(k3, (Cout,), dtype=jnp.float32)
    beta = 0.1 * jax.random.normal(k4, (Cout,), dtype=jnp.float32)

    out = conv_bn_3d(x, weight, gamma, beta)
    out = jax.block_until_ready(out)

    ref = _reference(x, weight, gamma, beta)
    assert out.shape == (N, Cout, D, H, W), out.shape
    max_err = float(jnp.max(jnp.abs(out - ref)))
    # bf16 MXU operands introduce ~1e-3-level absolute error vs the f32
    # HIGHEST-precision reference; 2e-2 is a comfortable bound.
    assert max_err < 2e-2, f"max abs err {max_err}"
    print("KERNEL_OK")
</pallas_src>

<mosaic_0001>
module attributes {stable_mosaic.version = 11 : i64} {
  func.func @_stats_kernel(%arg0: i32, %arg1: i32, %arg2: memref<512x128xbf16, #tpu.memory_space<vmem>>, %arg3: memref<128x128xbf16, #tpu.memory_space<vmem>>, %arg4: memref<1x1x128xf32, #tpu.memory_space<vmem>>, %arg5: memref<1x1x128xf32, #tpu.memory_space<vmem>>, %arg6: memref<512x128xf32, #tpu.memory_space<vmem>>) attributes {dimension_semantics = [#tpu.dimension_semantics<parallel>, #tpu.dimension_semantics<arbitrary>], iteration_bounds = array<i64: 2, 1>, scalar_prefetch = 0 : i64, scratch_operands = 1 : i64, tpu.core_type = #tpu.core_type<tc>, window_params = [{transform_indices = @transform_0, window_bounds = array<i64: 512, 128>}, {transform_indices = @transform_1, window_bounds = array<i64: 128, 128>}, {transform_indices = @transform_2, window_bounds = array<i64: 1, 1, 128>}, {transform_indices = @transform_3, window_bounds = array<i64: 1, 1, 128>}]} {
    %c0_i32 = arith.constant 0 : i32
    %0 = arith.cmpi eq, %arg1, %c0_i32 : i32
    %1 = arith.extui %0 : i1 to i32
    %c0_i32_0 = arith.constant 0 : i32
    %2 = arith.cmpi ne, %1, %c0_i32_0 : i32
    scf.if %2 {
      %cst_10 = arith.constant 0.000000e+00 : f32
      %12 = vector.broadcast %cst_10 : f32 to vector<512x128xf32>
      %c0_11 = arith.constant 0 : index
      %c0_12 = arith.constant 0 : index
      %13 = vector.load %arg6[%c0_11, %c0_12] : memref<512x128xf32, #tpu.memory_space<vmem>>, vector<512x128xf32>
      tpu.vector_store %arg6[%c0_11, %c0_12], %12 {strides = array<i32>} : memref<512x128xf32, #tpu.memory_space<vmem>>, vector<512x128xf32>,
    } else {
    }
    %c0 = arith.constant 0 : index
    %c0_1 = arith.constant 0 : index
    %3 = vector.load %arg6[%c0, %c0_1] : memref<512x128xf32, #tpu.memory_space<vmem>>, vector<512x128xf32>
    %c0_2 = arith.constant 0 : index
    %c0_3 = arith.constant 0 : index
    %4 = vector.load %arg2[%c0_2, %c0_3] : memref<512x128xbf16, #tpu.memory_space<vmem>>, vector<512x128xbf16>
    %c0_4 = arith.constant 0 : index
    %c0_5 = arith.constant 0 : index
    %5 = vector.load %arg3[%c0_4, %c0_5] : memref<128x128xbf16, #tpu.memory_space<vmem>>, vector<128x128xbf16>
    %cst = arith.constant dense<0.000000e+00> : vector<512x128xf32>
    %6 = tpu.matmul %4, %5, %cst {dimension_numbers = #tpu.dot_dimension_numbers<[1], [0], [0], [1], [0, 0, 1, 1], [], []>} : vector<512x128xbf16>, vector<128x128xbf16>, vector<512x128xf32> -> vector<512x128xf32>
    %7 = arith.addf %3, %6 : vector<512x128xf32>
    %c0_6 = arith.constant 0 : index
    %c0_7 = arith.constant 0 : index
    %8 = vector.load %arg6[%c0_6, %c0_7] : memref<512x128xf32, #tpu.memory_space<vmem>>, vector<512x128xf32>
    tpu.vector_store %arg6[%c0_6, %c0_7], %7 {strides = array<i32>} : memref<512x128xf32, #tpu.memory_space<vmem>>, vector<512x128xf32>,
    %c0_i32_8 = arith.constant 0 : i32
    %9 = arith.cmpi eq, %arg1, %c0_i32_8 : i32
    %10 = arith.extui %9 : i1 to i32
    %c0_i32_9 = arith.constant 0 : i32
    %11 = arith.cmpi ne, %10, %c0_i32_9 : i32
    scf.if %11 {
      %c0_10 = arith.constant 0 : index
      %c0_11 = arith.constant 0 : index
      %12 = vector.load %arg6[%c0_10, %c0_11] : memref<512x128xf32, #tpu.memory_space<vmem>>, vector<512x128xf32>
      %cst_12 = arith.constant dense<0.000000e+00> : vector<128xf32>
      %13 = vector.multi_reduction <add>, %12, %cst_12 [0] : vector<512x128xf32> to vector<128xf32>
      %14 = vector.shape_cast %13 : vector<128xf32> to vector<1x1x128xf32>
      %c0_13 = arith.constant 0 : index
      %c0_14 = arith.constant 0 : index
      %c0_15 = arith.constant 0 : index
      %15 = vector.load %arg4[%c0_13, %c0_14, %c0_15] : memref<1x1x128xf32, #tpu.memory_space<vmem>>, vector<1x1x128xf32>
      tpu.vector_store %arg4[%c0_13, %c0_14, %c0_15], %14 {strides = array<i32>} : memref<1x1x128xf32, #tpu.memory_space<vmem>>, vector<1x1x128xf32>,
      %16 = arith.mulf %12, %12 : vector<512x128xf32>
      %cst_16 = arith.constant dense<0.000000e+00> : vector<128xf32>
      %17 = vector.multi_reduction <add>, %16, %cst_16 [0] : vector<512x128xf32> to vector<128xf32>
      %18 = vector.shape_cast %17 : vector<128xf32> to vector<1x1x128xf32>
      %c0_17 = arith.constant 0 : index
      %c0_18 = arith.constant 0 : index
      %c0_19 = arith.constant 0 : index
      %19 = vector.load %arg5[%c0_17, %c0_18, %c0_19] : memref<1x1x128xf32, #tpu.memory_space<vmem>>, vector<1x1x128xf32>
      tpu.vector_store %arg5[%c0_17, %c0_18, %c0_19], %18 {strides = array<i32>} : memref<1x1x128xf32, #tpu.memory_space<vmem>>, vector<1x1x128xf32>,
    } else {
    }
    return
  }
  func.func @transform_0(%arg0: i32, %arg1: i32) -> (i32, i32) {
    %c0_i32 = arith.constant 0 : i32
    return %arg0, %arg1 : i32, i32
  }
  func.func @transform_1(%arg0: i32, %arg1: i32) -> (i32, i32) {
    %c0_i32 = arith.constant 0 : i32
    %c0_i32_0 = arith.constant 0 : i32
    return %arg1, %c0_i32 : i32, i32
  }
  func.func @transform_2(%arg0: i32, %arg1: i32) -> (i32, i32, i32) {
    %c0_i32 = arith.constant 0 : i32
    %c0_i32_0 = arith.constant 0 : i32
    %c0_i32_1 = arith.constant 0 : i32
    return %arg0, %c0_i32, %c0_i32_0 : i32, i32, i32
  }
  func.func @transform_3(%arg0: i32, %arg1: i32) -> (i32, i32, i32) {
    %c0_i32 = arith.constant 0 : i32
    %c0_i32_0 = arith.constant 0 : i32
    %c0_i32_1 = arith.constant 0 : i32
    return %arg0, %c0_i32, %c0_i32_0 : i32, i32, i32
  }
}

</mosaic_0001>

<llo_original>
// kernel: tpu_custom_call.1
$region0: #{tpu_custom_call.1}
  #allocation0 [shape = 'u32[]', space=smem, size = 0x4, offset = 0x4, fixed_abs, tag = 'smem constant byte address 0x4 - core index']
  #allocation1 [shape = 'u32[144,128]{1,0:T(1,128)}', space=vmem, size = 0x12000, scoped, tag = 'internal scratch']
  #allocation2 [shape = 'f32[512,128]{1,0:T(8,128)}', space=vmem, size = 0x40000, scoped, tag = 'scratch operand']
  %s0 = inlined_call_operand.hbm [shape: bf16[1024,128], index: 0, kind: input, shape index: {}]
  %s1 = inlined_call_operand.hbm [shape: bf16[128,128], index: 1, kind: input, shape index: {}]
  %s2 = inlined_call_operand.hbm [shape: f32[2,1,128], index: 2, kind: output, shape index: {0}]
  %s3 = inlined_call_operand.hbm [shape: f32[2,1,128], index: 3, kind: output, shape index: {1}]
  %4 = xla_tuple %s2, %s3
  %s5 = sld [smem:[#allocation0]]
  $region65: #{tpu_custom_call.1} parent=0
    _
  %s7 = ssub.s32 1, %s5
  %s8 = scalar_select 0, %s7, %s5
  $region1: #{tpu_custom_call.1} parent=0
    #allocation3 [shape = 'u8[262144]{0}', space=vmem, size = 0x40000, scoped, tag = 'input window, operand 0']
    #allocation4 [shape = 's32[2]{0}', space=sflag, size = 0x8, scoped, tag = 'scoped memory for tpu_custom_call.1']
    #allocation5 [shape = 's32[2]{0}', space=sflag, size = 0x8, scoped, tag = 'scoped memory for tpu_custom_call.1']
    #allocation6 [shape = 'u8[32768]{0}', space=vmem, size = 0x8000, scoped, tag = 'input window, operand 1, single buffered']
    #allocation7 [shape = 's32[1]{0}', space=sflag, size = 0x4, scoped, tag = 'scoped memory for tpu_custom_call.1']
    #allocation8 [shape = 'u8[1024]{0}', space=vmem, size = 0x400, scoped, tag = 'output window, operand 0']
    #allocation9 [shape = 'u8[1024]{0}', space=vmem, size = 0x400, scoped, tag = 'output window, operand 1']
    #allocation10 [shape = 's32[2]{0}', space=sflag, size = 0x8, scoped, tag = 'scoped memory for tpu_custom_call.1']
    %9 = vsyncpa [#allocation4], 0
    %s10 = scalar_lea.sflag [#allocation4], 1
    %11 = vsyncpa %s10, 0
    %12 = vsyncpa [#allocation7], 0
    %13 = vsyncpa [#allocation5], 0
    %s14 = scalar_lea.sflag [#allocation5], 1
    %15 = vsyncpa %s14, 0
    %16 = vsyncpa [#allocation10], 0
    %s17 = scalar_lea.sflag [#allocation10], 1
    %18 = vsyncpa %s17, 0
    loop: start=0, step=1, limit=4
    $region2: #{tpu_custom_call.1} parent=1 // loop_pre_header
      _
    $region3: #{tpu_custom_call.1} parent=1 // loop_header
      %s20 = sphi 0, %s24
      %p21 = scmp.ge.s32.totalorder %s20, 4
      %s27 = sphi 0, %s39
      %s28 = sphi 0, %s35
      %s29 = sphi 0, %s27
      %s30 = sphi 0, %s28
      %s31 = sphi 0, %s29
      %s32 = sphi 0, %s30
      %s44 = sphi 0, %s46
      %s47 = sphi 0, %s44
      %s48 = sphi 0, %s47
      %s64 = sphi 0, %s48
      %s70 = sphi 0, %s72
      %s73 = sphi 0, %s70
      %s74 = sphi 0, %s73
      %s90 = sphi 0, %s74
      %s96 = sphi 0, %s98
      %s99 = sphi 0, %s96
      %s100 = sphi 0, %s99
      %s116 = sphi 0, %s100
      %s122 = sphi 0, %s124
      %s125 = sphi 0, %s122
      %s126 = sphi 0, %s125
      %s142 = sphi 0, %s126
    $region4: #{tpu_custom_call.1} parent=1 // loop_header_branch
      %23 = sbr.rel (%p21) target = $region8
    $region5: #{tpu_custom_call.1} parent=1 // loop_body
      %s25 = ssub.s32 %s20, 1
      %s26 = ssub.s32 %s20, 2
      %s33 = sadd.s32 1, %s28
      %p34 = scmp.ge.s32.totalorder %s33, 1
      %s35 = scalar_select %p34, 0, %s33
      %s36 = sadd.s32 1, %s27
      %s37 = scalar_select %p34, %s36, %s27
      %p38 = scmp.ge.s32.totalorder %s37, 2
      %s39 = scalar_select %p38, 0, %s37
      %s40 = ssub.s32 %s27, %s39
      %s41 = ssub.s32 %s28, %s35
      %s42 = sor.u32 %s40, %s41
      %p43 = scmp.eq.s32.totalorder %s42, 0
      %s45 = sadd.s32 %s44, 1
      %s46 = scalar_select %p43, %s44, %s45
      %p49 = pneg %p43
      %p50 = scmp.eq.s32.totalorder %s20, 1
      %p51 = por %p49, %p50
      %p52 = scmp.ne.s32.totalorder %s44, %s47
      %p53 = scmp.eq.s32.totalorder %s20, 0
      %p54 = por %p52, %p53
      %p55 = scmp.ne.s32.totalorder %s44, %s47
      %p56 = scmp.eq.s32.totalorder %s25, 1
      %p57 = por %p55, %p56
      %p58 = scmp.ne.s32.totalorder %s47, %s48
      %p59 = scmp.eq.s32.totalorder %s25, 0
      %p60 = por %p58, %p59
      %p61 = scmp.ne.s32.totalorder %s47, %s48
      %p62 = scmp.eq.s32.totalorder %s26, 1
      %p63 = por %p61, %p62
      %p65 = scmp.ne.s32.totalorder %s48, %s64
      %p66 = scmp.eq.s32.totalorder %s26, 0
      %p67 = por %p65, %p66
      %s68 = ssub.s32 %s28, %s35
      %p69 = scmp.eq.s32.totalorder %s68, 0
      %s71 = sadd.s32 %s70, 1
      %s72 = scalar_select %p69, %s70, %s71
      %p75 = pneg %p69
      %p76 = scmp.eq.s32.totalorder %s20, 1
      %p77 = por %p75, %p76
      %p78 = scmp.ne.s32.totalorder %s70, %s73
      %p79 = scmp.eq.s32.totalorder %s20, 0
      %p80 = por %p78, %p79
      %p81 = scmp.ne.s32.totalorder %s70, %s73
      %p82 = scmp.eq.s32.totalorder %s25, 1
      %p83 = por %p81, %p82
      %p84 = scmp.ne.s32.totalorder %s73, %s74
      %p85 = scmp.eq.s32.totalorder %s25, 0
      %p86 = por %p84, %p85
      %p87 = scmp.ne.s32.totalorder %s73, %s74
      %p88 = scmp.eq.s32.totalorder %s26, 1
      %p89 = por %p87, %p88
      %p91 = scmp.ne.s32.totalorder %s74, %s90
      %p92 = scmp.eq.s32.totalorder %s26, 0
      %p93 = por %p91, %p92
      %s94 = ssub.s32 %s27, %s39
      %p95 = scmp.eq.s32.totalorder %s94, 0
      %s97 = sadd.s32 %s96, 1
      %s98 = scalar_select %p95, %s96, %s97
      %p101 = pneg %p95
      %p102 = scmp.eq.s32.totalorder %s20, 1
      %p103 = por %p101, %p102
      %p104 = scmp.ne.s32.totalorder %s96, %s99
      %p105 = scmp.eq.s32.totalorder %s20, 0
      %p106 = por %p104, %p105
      %p107 = scmp.ne.s32.totalorder %s96, %s99
      %p108 = scmp.eq.s32.totalorder %s25, 1
      %p109 = por %p107, %p108
      %p110 = scmp.ne.s32.totalorder %s99, %s100
      %p111 = scmp.eq.s32.totalorder %s25, 0
      %p112 = por %p110, %p111
      %p113 = scmp.ne.s32.totalorder %s99, %s100
      %p114 = scmp.eq.s32.totalorder %s26, 1
      %p115 = por %p113, %p114
      %p117 = scmp.ne.s32.totalorder %s100, %s116
      %p118 = scmp.eq.s32.totalorder %s26, 0
      %p119 = por %p117, %p118
      %s120 = ssub.s32 %s27, %s39
      %p121 = scmp.eq.s32.totalorder %s120, 0
      %s123 = sadd.s32 %s122, 1
      %s124 = scalar_select %p121, %s122, %s123
      %p127 = pneg %p121
      %p128 = scmp.eq.s32.totalorder %s20, 1
      %p129 = por %p127, %p128
      %p130 = scmp.ne.s32.totalorder %s122, %s125
      %p131 = scmp.eq.s32.totalorder %s20, 0
      %p132 = por %p130, %p131
      %p133 = scmp.ne.s32.totalorder %s122, %s125
      %p134 = scmp.eq.s32.totalorder %s25, 1
      %p135 = por %p133, %p134
      %p136 = scmp.ne.s32.totalorder %s125, %s126
      %p137 = scmp.eq.s32.totalorder %s25, 0
      %p138 = por %p136, %p137
      %p139 = scmp.ne.s32.totalorder %s125, %s126
      %p140 = scmp.eq.s32.totalorder %s26, 1
      %p141 = por %p139, %p140
      %p143 = scmp.ne.s32.totalorder %s126, %s142
      %p144 = scmp.eq.s32.totalorder %s26, 0
      %p145 = por %p143, %p144
      %p146 = scmp.le.s32.totalorder 1, %s20
      %p147 = scmp.lt.s32.totalorder %s20, 3
      %p148 = pnand %p146, %p147
      %p149 = pneg %p148
      // Predicated region
      $region9: #{tpu_custom_call.1} parent=5 // pred_check
        _
      $region10: #{tpu_custom_call.1} parent=5 // pred_check_branch
        %151 = sbr.rel (%p148) target = $region12
      $region11: #{tpu_custom_call.1} parent=5 // pred_region
        %s152 = ssub.s32 %s20, 1
        // Predicated region
        $region13: #{tpu_custom_call.1} parent=11 // pred_check
          %p153 = pneg %p86
        $region14: #{tpu_custom_call.1} parent=11 // pred_check_branch
          %155 = sbr.rel (%p153) target = $region16
        $region15: #{tpu_custom_call.1} parent=11 // pred_region
          %s156 = smul.u32 16, %s30
          %s158 = ssub.s32 1024, 1024
          %159 = vsyncadd [#allocation7], %s158
          %s160 = smul.addr %s156, 64
          %s161 = scalar_lea.hbm %s1, %s160
          %s162 = sshll.u32 [#allocation6], 4
          %s163 = int_to_ptr.vmem [resolvable:$true] %s162
          %168 = dma.hbm_to_vmem [thread:$0]  %s161, 1024, %s163, [#allocation7], 64, 64, 4
        $region16: #{tpu_custom_call.1} parent=11 // pred_fallthru
          _
      $region12: #{tpu_custom_call.1} parent=5 // pred_fallthru
        _
      %p169 = scmp.lt.s32.totalorder %s20, 2
      // Predicated region
      $region17: #{tpu_custom_call.1} parent=5 // pred_check
        %p170 = pneg %p169
      $region18: #{tpu_custom_call.1} parent=5 // pred_check_branch
        %172 = sbr.rel (%p170) target = $region20
      $region19: #{tpu_custom_call.1} parent=5 // pred_region
        // Predicated region
        $region21: #{tpu_custom_call.1} parent=19 // pred_check
          %p173 = pneg %p54
        $region22: #{tpu_custom_call.1} parent=19 // pred_check_branch
          %175 = sbr.rel (%p173) target = $region24
        $region23: #{tpu_custom_call.1} parent=19 // pred_region
          %s176 = sand.u32 %s44, 1
          %s177 = scalar_lea.sflag [#allocation4], %s176
          %s178 = sand.u32 %s44, 1
          %s179 = smul.addr %s178, 256
          %s180 = scalar_lea.vmem [#allocation3], %s179
          %s181 = smul.u32 64, %s27
          %s183 = ssub.s32 4096, 4096
          %184 = vsyncadd %s177, %s183
          %s185 = sadd.s32 %s28, %s181
          %s186 = smul.addr %s185, 64
          %s187 = scalar_lea.hbm %s0, %s186
          %s188 = sshll.u32 %s180, 4
          %s189 = int_to_ptr.vmem [resolvable:$true] %s188
          %194 = dma.hbm_to_vmem [thread:$0]  %s187, 4096, %s189, %s177, 64, 64, 4
        $region24: #{tpu_custom_call.1} parent=19 // pred_fallthru
          _
      $region20: #{tpu_custom_call.1} parent=5 // pred_fallthru
        _
      %p195 = scmp.le.s32.totalorder 1, %s20
      %p196 = scmp.lt.s32.totalorder %s20, 3
      %p197 = pnand %p195, %p196
      %p198 = pneg %p197
      // Predicated region
      $region25: #{tpu_custom_call.1} parent=5 // pred_check
        _
      $region26: #{tpu_custom_call.1} parent=5 // pred_check_branch
        %200 = sbr.rel (%p197) target = $region28
      $region27: #{tpu_custom_call.1} parent=5 // pred_region
        %s201 = ssub.s32 %s20, 1
        %s202 = sand.u32 %s47, 1
        %s203 = scalar_lea.sflag [#allocation4], %s202
        %s204 = sand.u32 %s47, 1
        %s205 = smul.addr %s204, 256
        %s206 = scalar_lea.vmem [#allocation3], %s205
        // Predicated region
        $region29: #{tpu_custom_call.1} parent=27 // pred_check
          %p207 = pneg %p60
        $region30: #{tpu_custom_call.1} parent=27 // pred_check_branch
          %209 = sbr.rel (%p207) target = $region32
        $region31: #{tpu_custom_call.1} parent=27 // pred_region
          %210 = dma.done %s203, 4096
        $region32: #{tpu_custom_call.1} parent=27 // pred_fallthru
          _
        // Predicated region
        $region33: #{tpu_custom_call.1} parent=27 // pred_check
          %p211 = pneg %p86
        $region34: #{tpu_custom_call.1} parent=27 // pred_check_branch
          %213 = sbr.rel (%p211) target = $region36
        $region35: #{tpu_custom_call.1} parent=27 // pred_region
          %214 = dma.done [#allocation7], 1024
        $region36: #{tpu_custom_call.1} parent=27 // pred_fallthru
          _
        %s215 = sand.u32 %s47, 1
        %s216 = scalar_lea.sflag [#allocation4], %s215
        %s217 = sand.u32 %s47, 1
        %s218 = smul.addr %s217, 256
        %s219 = scalar_lea.vmem [#allocation3], %s218
        %p220 = pneg %p60
        %p221 = pneg %p57
        %p222 = pneg %p86
        %p223 = pneg %p83
        %p224 = pneg %p112
        %p225 = pneg %p109
        %s226 = sand.u32 %s99, 1
        %s227 = scalar_lea.sflag [#allocation5], %s226
        %s228 = sand.u32 %s99, 1
        %s229 = scalar_lea.vmem [#allocation8], %s228
        %p230 = pneg %p138
        %p231 = pneg %p135
        %s232 = sand.u32 %s125, 1
        %s233 = scalar_lea.sflag [#allocation10], %s232
        %s234 = sand.u32 %s125, 1
        %s235 = scalar_lea.vmem [#allocation9], %s234
        %s236 = smul.u32 64, %s29
        %s237 = smul.u32 16, %s30
        %p239 = scmp.eq.s32.totalorder %s30, 0
        // Predicated region
        $region37: #{tpu_custom_call.1} parent=27 // pred_check
          %p240 = pneg %p239
        $region38: #{tpu_custom_call.1} parent=27 // pred_check_branch
          %242 = sbr.rel (%p240) target = $region40
        $region39: #{tpu_custom_call.1} parent=27 // pred_region
          %243 = vst [vmem:[#allocation2] sm:$0xff] 0.0
          %244 = vst [vmem:[#allocation2 + $0x8] sm:$0xff] 0.0
          %245 = vst [vmem:[#allocation2 + $0x10] sm:$0xff] 0.0
          %246 = vst [vmem:[#allocation2 + $0x18] sm:$0xff] 0.0
          %247 = vst [vmem:[#allocation2 + $0x20] sm:$0xff] 0.0
          %248 = vst [vmem:[#allocation2 + $0x28] sm:$0xff] 0.0
          %249 = vst [vmem:[#allocation2 + $0x30] sm:$0xff] 0.0
          %250 = vst [vmem:[#allocation2 + $0x38] sm:$0xff] 0.0
          %251 = vst [vmem:[#allocation2 + $0x40] sm:$0xff] 0.0
          %252 = vst [vmem:[#allocation2 + $0x48] sm:$0xff] 0.0
          %253 = vst [vmem:[#allocation2 + $0x50] sm:$0xff] 0.0
          %254 = vst [vmem:[#allocation2 + $0x58] sm:$0xff] 0.0
          %255 = vst [vmem:[#allocation2 + $0x60] sm:$0xff] 0.0
          %256 = vst [vmem:[#allocation2 + $0x68] sm:$0xff] 0.0
          %257 = vst [vmem:[#allocation2 + $0x70] sm:$0xff] 0.0
          %258 = vst [vmem:[#allocation2 + $0x78] sm:$0xff] 0.0
          %259 = vst [vmem:[#allocation2 + $0x80] sm:$0xff] 0.0
          %260 = vst [vmem:[#allocation2 + $0x88] sm:$0xff] 0.0
          %261 = vst [vmem:[#allocation2 + $0x90] sm:$0xff] 0.0
          %262 = vst [vmem:[#allocation2 + $0x98] sm:$0xff] 0.0
          %263 = vst [vmem:[#allocation2 + $0xa0] sm:$0xff] 0.0
          %264 = vst [vmem:[#allocation2 + $0xa8] sm:$0xff] 0.0
          %265 = vst [vmem:[#allocation2 + $0xb0] sm:$0xff] 0.0
          %266 = vst [vmem:[#allocation2 + $0xb8] sm:$0xff] 0.0
          %267 = vst [vmem:[#allocation2 + $0xc0] sm:$0xff] 0.0
          %268 = vst [vmem:[#allocation2 + $0xc8] sm:$0xff] 0.0
          %269 = vst [vmem:[#allocation2 + $0xd0] sm:$0xff] 0.0
          %270 = vst [vmem:[#allocation2 + $0xd8] sm:$0xff] 0.0
          %271 = vst [vmem:[#allocation2 + $0xe0] sm:$0xff] 0.0
          %272 = vst [vmem:[#allocation2 + $0xe8] sm:$0xff] 0.0
          %273 = vst [vmem:[#allocation2 + $0xf0] sm:$0xff] 0.0
          %274 = vst [vmem:[#allocation2 + $0xf8] sm:$0xff] 0.0
          %275 = vst [vmem:[#allocation2 + $0x100] sm:$0xff] 0.0
          %276 = vst [vmem:[#allocation2 + $0x108] sm:$0xff] 0.0
          %277 = vst [vmem:[#allocation2 + $0x110] sm:$0xff] 0.0
          %278 = vst [vmem:[#allocation2 + $0x118] sm:$0xff] 0.0
          %279 = vst [vmem:[#allocation2 + $0x120] sm:$0xff] 0.0
          %280 = vst [vmem:[#allocation2 + $0x128] sm:$0xff] 0.0
          %281 = vst [vmem:[#allocation2 + $0x130] sm:$0xff] 0.0
          %282 = vst [vmem:[#allocation2 + $0x138] sm:$0xff] 0.0
          %283 = vst [vmem:[#allocation2 + $0x140] sm:$0xff] 0.0
          %284 = vst [vmem:[#allocation2 + $0x148] sm:$0xff] 0.0
          %285 = vst [vmem:[#allocation2 + $0x150] sm:$0xff] 0.0
          %286 = vst [vmem:[#allocation2 + $0x158] sm:$0xff] 0.0
          %287 = vst [vmem:[#allocation2 + $0x160] sm:$0xff] 0.0
          %288 = vst [vmem:[#allocation2 + $0x168] sm:$0xff] 0.0
          %289 = vst [vmem:[#allocation2 + $0x170] sm:$0xff] 0.0
          %290 = vst [vmem:[#allocation2 + $0x178] sm:$0xff] 0.0
          %291 = vst [vmem:[#allocation2 + $0x180] sm:$0xff] 0.0
          %292 = vst [vmem:[#allocation2 + $0x188] sm:$0xff] 0.0
          %293 = vst [vmem:[#allocation2 + $0x190] sm:$0xff] 0.0
          %294 = vst [vmem:[#allocation2 + $0x198] sm:$0xff] 0.0
          %295 = vst [vmem:[#allocation2 + $0x1a0] sm:$0xff] 0.0
          %296 = vst [vmem:[#allocation2 + $0x1a8] sm:$0xff] 0.0
          %297 = vst [vmem:[#allocation2 + $0x1b0] sm:$0xff] 0.0
          %298 = vst [vmem:[#allocation2 + $0x1b8] sm:$0xff] 0.0
          %299 = vst [vmem:[#allocation2 + $0x1c0] sm:$0xff] 0.0
          %300 = vst [vmem:[#allocation2 + $0x1c8] sm:$0xff] 0.0
          %301 = vst [vmem:[#allocation2 + $0x1d0] sm:$0xff] 0.0
          %302 = vst [vmem:[#allocation2 + $0x1d8] sm:$0xff] 0.0
          %303 = vst [vmem:[#allocation2 + $0x1e0] sm:$0xff] 0.0
          %304 = vst [vmem:[#allocation2 + $0x1e8] sm:$0xff] 0.0
          %305 = vst [vmem:[#allocation2 + $0x1f0] sm:$0xff] 0.0
          %306 = vst [vmem:[#allocation2 + $0x1f8] sm:$0xff] 0.0
        $region40: #{tpu_custom_call.1} parent=27 // pred_fallthru
          _
        %v307 = vld [vmem:[#allocation2] sm:$0xff]
        %v308 = vld [vmem:[#allocation2 + $0x8] sm:$0xff]
        %v309 = vld [vmem:[#allocation2 + $0x10] sm:$0xff]
        %v310 = vld [vmem:[#allocation2 + $0x18] sm:$0xff]
        %v311 = vld [vmem:[#allocation2 + $0x20] sm:$0xff]
        %v312 = vld [vmem:[#allocation2 + $0x28] sm:$0xff]
        %v313 = vld [vmem:[#allocation2 + $0x30] sm:$0xff]
        %v314 = vld [vmem:[#allocation2 + $0x38] sm:$0xff]
        %v315 = vld [vmem:[#allocation2 + $0x40] sm:$0xff]
        %v316 = vld [vmem:[#allocation2 + $0x48] sm:$0xff]
        %v317 = vld [vmem:[#allocation2 + $0x50] sm:$0xff]
        %v318 = vld [vmem:[#allocation2 + $0x58] sm:$0xff]
        %v319 = vld [vmem:[#allocation2 + $0x60] sm:$0xff]
        %v320 = vld [vmem:[#allocation2 + $0x68] sm:$0xff]
        %v321 = vld [vmem:[#allocation2 + $0x70] sm:$0xff]
        %v322 = vld [vmem:[#allocation2 + $0x78] sm:$0xff]
        %v323 = vld [vmem:[#allocation2 + $0x80] sm:$0xff]
        %v324 = vld [vmem:[#allocation2 + $0x88] sm:$0xff]
        %v325 = vld [vmem:[#allocation2 + $0x90] sm:$0xff]
        %v326 = vld [vmem:[#allocation2 + $0x98] sm:$0xff]
        %v327 = vld [vmem:[#allocation2 + $0xa0] sm:$0xff]
        %v328 = vld [vmem:[#allocation2 + $0xa8] sm:$0xff]
        %v329 = vld [vmem:[#allocation2 + $0xb0] sm:$0xff]
        %v330 = vld [vmem:[#allocation2 + $0xb8] sm:$0xff]
        %v331 = vld [vmem:[#allocation2 + $0xc0] sm:$0xff]
        %v332 = vld [vmem:[#allocation2 + $0xc8] sm:$0xff]
        %v333 = vld [vmem:[#allocation2 + $0xd0] sm:$0xff]
        %v334 = vld [vmem:[#allocation2 + $0xd8] sm:$0xff]
        %v335 = vld [vmem:[#allocation2 + $0xe0] sm:$0xff]
        %v336 = vld [vmem:[#allocation2 + $0xe8] sm:$0xff]
        %v337 = vld [vmem:[#allocation2 + $0xf0] sm:$0xff]
        %v338 = vld [vmem:[#allocation2 + $0xf8] sm:$0xff]
        %v339 = vld [vmem:[#allocation2 + $0x100] sm:$0xff]
        %v340 = vld [vmem:[#allocation2 + $0x108] sm:$0xff]
        %v341 = vld [vmem:[#allocation2 + $0x110] sm:$0xff]
        %v342 = vld [vmem:[#allocation2 + $0x118] sm:$0xff]
        %v343 = vld [vmem:[#allocation2 + $0x120] sm:$0xff]
        %v344 = vld [vmem:[#allocation2 + $0x128] sm:$0xff]
        %v345 = vld [vmem:[#allocation2 + $0x130] sm:$0xff]
        %v346 = vld [vmem:[#allocation2 + $0x138] sm:$0xff]
        %v347 = vld [vmem:[#allocation2 + $0x140] sm:$0xff]
        %v348 = vld [vmem:[#allocation2 + $0x148] sm:$0xff]
        %v349 = vld [vmem:[#allocation2 + $0x150] sm:$0xff]
        %v350 = vld [vmem:[#allocation2 + $0x158] sm:$0xff]
        %v351 = vld [vmem:[#allocation2 + $0x160] sm:$0xff]
        %v352 = vld [vmem:[#allocation2 + $0x168] sm:$0xff]
        %v353 = vld [vmem:[#allocation2 + $0x170] sm:$0xff]
        %v354 = vld [vmem:[#allocation2 + $0x178] sm:$0xff]
        %v355 = vld [vmem:[#allocation2 + $0x180] sm:$0xff]
        %v356 = vld [vmem:[#allocation2 + $0x188] sm:$0xff]
        %v357 = vld [vmem:[#allocation2 + $0x190] sm:$0xff]
        %v358 = vld [vmem:[#allocation2 + $0x198] sm:$0xff]
        %v359 = vld [vmem:[#allocation2 + $0x1a0] sm:$0xff]
        %v360 = vld [vmem:[#allocation2 + $0x1a8] sm:$0xff]
        %v361 = vld [vmem:[#allocation2 + $0x1b0] sm:$0xff]
        %v362 = vld [vmem:[#allocation2 + $0x1b8] sm:$0xff]
        %v363 = vld [vmem:[#allocation2 + $0x1c0] sm:$0xff]
        %v364 = vld [vmem:[#allocation2 + $0x1c8] sm:$0xff]
        %v365 = vld [vmem:[#allocation2 + $0x1d0] sm:$0xff]
        %v366 = vld [vmem:[#allocation2 + $0x1d8] sm:$0xff]
        %v367 = vld [vmem:[#allocation2 + $0x1e0] sm:$0xff]
        %v368 = vld [vmem:[#allocation2 + $0x1e8] sm:$0xff]
        %v369 = vld [vmem:[#allocation2 + $0x1f0] sm:$0xff]
        %v370 = vld [vmem:[#allocation2 + $0x1f8] sm:$0xff]
        %v371 = vld [vmem:[%s206] sm:$0xf]
        %v372 = vld [vmem:[%s206 + $0x4] sm:$0xf]
        %v373 = vld [vmem:[%s206 + $0x8] sm:$0xf]
        %v374 = vld [vmem:[%s206 + $0xc] sm:$0xf]
        %v375 = vld [vmem:[%s206 + $0x10] sm:$0xf]
        %v376 = vld [vmem:[%s206 + $0x14] sm:$0xf]
        %v377 = vld [vmem:[%s206 + $0x18] sm:$0xf]
        %v378 = vld [vmem:[%s206 + $0x1c] sm:$0xf]
        %v379 = vld [vmem:[%s206 + $0x20] sm:$0xf]
        %v380 = vld [vmem:[%s206 + $0x24] sm:$0xf]
        %v381 = vld [vmem:[%s206 + $0x28] sm:$0xf]
        %v382 = vld [vmem:[%s206 + $0x2c] sm:$0xf]
        %v383 = vld [vmem:[%s206 + $0x30] sm:$0xf]
        %v384 = vld [vmem:[%s206 + $0x34] sm:$0xf]
        %v385 = vld [vmem:[%s206 + $0x38] sm:$0xf]
        %v386 = vld [vmem:[%s206 + $0x3c] sm:$0xf]
        %v387 = vld [vmem:[%s206 + $0x40] sm:$0xf]
        %v388 = vld [vmem:[%s206 + $0x44] sm:$0xf]
        %v389 = vld [vmem:[%s206 + $0x48] sm:$0xf]
        %v390 = vld [vmem:[%s206 + $0x4c] sm:$0xf]
        %v391 = vld [vmem:[%s206 + $0x50] sm:$0xf]
        %v392 = vld [vmem:[%s206 + $0x54] sm:$0xf]
        %v393 = vld [vmem:[%s206 + $0x58] sm:$0xf]
        %v394 = vld [vmem:[%s206 + $0x5c] sm:$0xf]
        %v395 = vld [vmem:[%s206 + $0x60] sm:$0xf]
        %v396 = vld [vmem:[%s206 + $0x64] sm:$0xf]
        %v397 = vld [vmem:[%s206 + $0x68] sm:$0xf]
        %v398 = vld [vmem:[%s206 + $0x6c] sm:$0xf]
        %v399 = vld [vmem:[%s206 + $0x70] sm:$0xf]
        %v400 = vld [vmem:[%s206 + $0x74] sm:$0xf]
        %v401 = vld [vmem:[%s206 + $0x78] sm:$0xf]
        %v402 = vld [vmem:[%s206 + $0x7c] sm:$0xf]
        %v403 = vld [vmem:[%s206 + $0x80] sm:$0xf]
        %v404 = vld [vmem:[%s206 + $0x84] sm:$0xf]
        %v405 = vld [vmem:[%s206 + $0x88] sm:$0xf]
        %v406 = vld [vmem:[%s206 + $0x8c] sm:$0xf]
        %v407 = vld [vmem:[%s206 + $0x90] sm:$0xf]
        %v408 = vld [vmem:[%s206 + $0x94] sm:$0xf]
        %v409 = vld [vmem:[%s206 + $0x98] sm:$0xf]
        %v410 = vld [vmem:[%s206 + $0x9c] sm:$0xf]
        %v411 = vld [vmem:[%s206 + $0xa0] sm:$0xf]
        %v412 = vld [vmem:[%s206 + $0xa4] sm:$0xf]
        %v413 = vld [vmem:[%s206 + $0xa8] sm:$0xf]
        %v414 = vld [vmem:[%s206 + $0xac] sm:$0xf]
        %v415 = vld [vmem:[%s206 + $0xb0] sm:$0xf]
        %v416 = vld [vmem:[%s206 + $0xb4] sm:$0xf]
        %v417 = vld [vmem:[%s206 + $0xb8] sm:$0xf]
        %v418 = vld [vmem:[%s206 + $0xbc] sm:$0xf]
        %v419 = vld [vmem:[%s206 + $0xc0] sm:$0xf]
        %v420 = vld [vmem:[%s206 + $0xc4] sm:$0xf]
        %v421 = vld [vmem:[%s206 + $0xc8] sm:$0xf]
        %v422 = vld [vmem:[%s206 + $0xcc] sm:$0xf]
        %v423 = vld [vmem:[%s206 + $0xd0] sm:$0xf]
        %v424 = vld [vmem:[%s206 + $0xd4] sm:$0xf]
        %v425 = vld [vmem:[%s206 + $0xd8] sm:$0xf]
        %v426 = vld [vmem:[%s206 + $0xdc] sm:$0xf]
        %v427 = vld [vmem:[%s206 + $0xe0] sm:$0xf]
        %v428 = vld [vmem:[%s206 + $0xe4] sm:$0xf]
        %v429 = vld [vmem:[%s206 + $0xe8] sm:$0xf]
        %v430 = vld [vmem:[%s206 + $0xec] sm:$0xf]
        %v431 = vld [vmem:[%s206 + $0xf0] sm:$0xf]
        %v432 = vld [vmem:[%s206 + $0xf4] sm:$0xf]
        %v433 = vld [vmem:[%s206 + $0xf8] sm:$0xf]
        %v434 = vld [vmem:[%s206 + $0xfc] sm:$0xf]
        %v435 = vld [vmem:[#allocation6] sm:$0xf]
        %v436 = vld [vmem:[#allocation6 + $0x4] sm:$0xf]
        %v437 = vld [vmem:[#allocation6 + $0x8] sm:$0xf]
        %v438 = vld [vmem:[#allocation6 + $0xc] sm:$0xf]
        %v439 = vld [vmem:[#allocation6 + $0x10] sm:$0xf]
        %v440 = vld [vmem:[#allocation6 + $0x14] sm:$0xf]
        %v441 = vld [vmem:[#allocation6 + $0x18] sm:$0xf]
        %v442 = vld [vmem:[#allocation6 + $0x1c] sm:$0xf]
        %v443 = vld [vmem:[#allocation6 + $0x20] sm:$0xf]
        %v444 = vld [vmem:[#allocation6 + $0x24] sm:$0xf]
        %v445 = vld [vmem:[#allocation6 + $0x28] sm:$0xf]
        %v446 = vld [vmem:[#allocation6 + $0x2c] sm:$0xf]
        %v447 = vld [vmem:[#allocation6 + $0x30] sm:$0xf]
        %v448 = vld [vmem:[#allocation6 + $0x34] sm:$0xf]
        %v449 = vld [vmem:[#allocation6 + $0x38] sm:$0xf]
        %v450 = vld [vmem:[#allocation6 + $0x3c] sm:$0xf]
        %v515 = vunpack.c.l.b16 %v371
        %v516 = vunpack.c.l.b16 %v372
        %v517 = vunpack.c.l.b16 %v373
        %v518 = vunpack.c.l.b16 %v374
        %v519 = vunpack.c.l.b16 %v375
        %v520 = vunpack.c.l.b16 %v376
        %v521 = vunpack.c.l.b16 %v377
        %v522 = vunpack.c.l.b16 %v378
        %v523 = vunpack.c.l.b16 %v379
        %v524 = vunpack.c.l.b16 %v380
        %v525 = vunpack.c.l.b16 %v381
        %v526 = vunpack.c.l.b16 %v382
        %v527 = vunpack.c.l.b16 %v383
        %v528 = vunpack.c.l.b16 %v384
        %v529 = vunpack.c.l.b16 %v385
        %v530 = vunpack.c.l.b16 %v386
        %v531 = vunpack.c.l.b16 %v387
        %v532 = vunpack.c.l.b16 %v388
        %v533 = vunpack.c.l.b16 %v389
        %v534 = vunpack.c.l.b16 %v390
        %v535 = vunpack.c.l.b16 %v391
        %v536 = vunpack.c.l.b16 %v392
        %v537 = vunpack.c.l.b16 %v393
        %v538 = vunpack.c.l.b16 %v394
        %v539 = vunpack.c.l.b16 %v395
        %v540 = vunpack.c.l.b16 %v396
        %v541 = vunpack.c.l.b16 %v397
        %v542 = vunpack.c.l.b16 %v398
        %v543 = vunpack.c.l.b16 %v399
        %v544 = vunpack.c.l.b16 %v400
        %v545 = vunpack.c.l.b16 %v401
        %v546 = vunpack.c.l.b16 %v402
        %v547 = vunpack.c.l.b16 %v403
        %v548 = vunpack.c.l.b16 %v404
        %v549 = vunpack.c.l.b16 %v405
        %v550 = vunpack.c.l.b16 %v406
        %v551 = vunpack.c.l.b16 %v407
        %v552 = vunpack.c.l.b16 %v408
        %v553 = vunpack.c.l.b16 %v409
        %v554 = vunpack.c.l.b16 %v410
        %v555 = vunpack.c.l.b16 %v411
        %v556 = vunpack.c.l.b16 %v412
        %v557 = vunpack.c.l.b16 %v413
        %v558 = vunpack.c.l.b16 %v414
        %v559 = vunpack.c.l.b16 %v415
        %v560 = vunpack.c.l.b16 %v416
        %v561 = vunpack.c.l.b16 %v417
        %v562 = vunpack.c.l.b16 %v418
        %v563 = vunpack.c.l.b16 %v419
        %v564 = vunpack.c.l.b16 %v420
        %v565 = vunpack.c.l.b16 %v421
        %v566 = vunpack.c.l.b16 %v422
        %v567 = vunpack.c.l.b16 %v423
        %v568 = vunpack.c.l.b16 %v424
        %v569 = vunpack.c.l.b16 %v425
        %v570 = vunpack.c.l.b16 %v426
        %v571 = vunpack.c.l.b16 %v427
        %v572 = vunpack.c.l.b16 %v428
        %v573 = vunpack.c.l.b16 %v429
        %v574 = vunpack.c.l.b16 %v430
        %v575 = vunpack.c.l.b16 %v431
        %v576 = vunpack.c.l.b16 %v432
        %v577 = vunpack.c.l.b16 %v433
        %v578 = vunpack.c.l.b16 %v434
        %v579 = vpack.c.b16 %v516, %v515
        %v580 = vpack.c.b16 %v518, %v517
        %v581 = vpack.c.b16 %v520, %v519
        %v582 = vpack.c.b16 %v522, %v521
        %v583 = vpack.c.b16 %v524, %v523
        %v584 = vpack.c.b16 %v526, %v525
        %v585 = vpack.c.b16 %v528, %v527
        %v586 = vpack.c.b16 %v530, %v529
        %v587 = vpack.c.b16 %v532, %v531
        %v588 = vpack.c.b16 %v534, %v533
        %v589 = vpack.c.b16 %v536, %v535
        %v590 = vpack.c.b16 %v538, %v537
        %v591 = vpack.c.b16 %v540, %v539
        %v592 = vpack.c.b16 %v542, %v541
        %v593 = vpack.c.b16 %v544, %v543
        %v594 = vpack.c.b16 %v546, %v545
        %v595 = vpack.c.b16 %v548, %v547
        %v596 = vpack.c.b16 %v550, %v549
        %v597 = vpack.c.b16 %v552, %v551
        %v598 = vpack.c.b16 %v554, %v553
        %v599 = vpack.c.b16 %v556, %v555
        %v600 = vpack.c.b16 %v558, %v557
        %v601 = vpack.c.b16 %v560, %v559
        %v602 = vpack.c.b16 %v562, %v561
        %v603 = vpack.c.b16 %v564, %v563
        %v604 = vpack.c.b16 %v566, %v565
        %v605 = vpack.c.b16 %v568, %v567
        %v606 = vpack.c.b16 %v570, %v569
        %v607 = vpack.c.b16 %v572, %v571
        %v608 = vpack.c.b16 %v574, %v573
        %v609 = vpack.c.b16 %v576, %v575
        %v610 = vpack.c.b16 %v578, %v577
        %v659 = vunpack.c.l.b16 %v435
        %v660 = vunpack.c.l.b16 %v436
        %v661 = vunpack.c.l.b16 %v437
        %v662 = vunpack.c.l.b16 %v438
        %v663 = vunpack.c.l.b16 %v439
        %v664 = vunpack.c.l.b16 %v440
        %v665 = vunpack.c.l.b16 %v441
        %v666 = vunpack.c.l.b16 %v442
        %v667 = vunpack.c.l.b16 %v443
        %v668 = vunpack.c.l.b16 %v444
        %v669 = vunpack.c.l.b16 %v445
        %v670 = vunpack.c.l.b16 %v446
        %v671 = vunpack.c.l.b16 %v447
        %v672 = vunpack.c.l.b16 %v448
        %v673 = vunpack.c.l.b16 %v449
        %v674 = vunpack.c.l.b16 %v450
        %v675 = vpack.c.b16 %v660, %v659
        %v676 = vpack.c.b16 %v662, %v661
        %v677 = vpack.c.b16 %v664, %v663
        %v678 = vpack.c.b16 %v666, %v665
        %v679 = vpack.c.b16 %v668, %v667
        %v680 = vpack.c.b16 %v670, %v669
        %v681 = vpack.c.b16 %v672, %v671
        %v682 = vpack.c.b16 %v674, %v673
        %691 = vmatprep.subr.bf16.mxu0 0
        %692 = vmatpush1.bf16.msra.mxu0 %v682
        %693 = vmatprep.subr.bf16.mxu0 0
        %694 = vmatpush1.bf16.msra.mxu0 %v681
        %695 = vmatprep.subr.bf16.mxu0 0
        %696 = vmatpush1.bf16.msra.mxu0 %v680
        %697 = vmatprep.subr.bf16.mxu0 0
        %698 = vmatpush1.bf16.msra.mxu0 %v679
        %699 = vmatprep.subr.bf16.mxu0 0
        %700 = vmatpush1.bf16.msra.mxu0 %v678
        %701 = vmatprep.subr.bf16.mxu0 0
        %702 = vmatpush1.bf16.msra.mxu0 %v677
        %703 = vmatprep.subr.bf16.mxu0 0
        %704 = vmatpush1.bf16.msra.mxu0 %v676
        %705 = vmatprep.subr.bf16.mxu0 0
        %706 = vmatpush1.bf16.msra.mxu0 %v675
        %707 = vmatprep.subr.bf16.mxu0 0
        %708 = vmatpush2.bf16.msra.mxu0 0
        %709 = vmatprep.subr.bf16.mxu0 0
        %710 = vmatpush2.bf16.msra.mxu0 0
        %711 = vmatprep.subr.bf16.mxu0 0
        %712 = vmatpush2.bf16.msra.mxu0 0
        %713 = vmatprep.subr.bf16.mxu0 0
        %714 = vmatpush2.bf16.msra.mxu0 0
        %715 = vmatprep.subr.bf16.mxu0 0
        %716 = vmatpush2.bf16.msra.mxu0 0
        %717 = vmatprep.subr.bf16.mxu0 0
        %718 = vmatpush2.bf16.msra.mxu0 0
        %719 = vmatprep.subr.bf16.mxu0 0
        %720 = vmatpush2.bf16.msra.mxu0 0
        %721 = vmatprep.subr.bf16.mxu0 0
        %722 = vmatpush2.bf16.msra.mxu0 0
        %723 = vmatprep.mubr.bf16.mxu0 0
        %724 = vmatmul.mubr.bf16.gmra.mxu0 %v579
        %v725 = vpop.f32.mrf.mxu0
        %v726 = vadd.f32 0.0, %v725
        %v727 = vpop.f32.mrf.mxu0
        %v728 = vpop.f32.mrf.mxu0
        %v729 = vadd.f32 0.0, %v728
        %v730 = vpop.f32.mrf.mxu0
        %731 = vmatprep.mubr.bf16.mxu0 0
        %732 = vmatmul.mubr.bf16.gmra.mxu0 %v580
        %v733 = vpop.f32.mrf.mxu0
        %v734 = vadd.f32 0.0, %v733
        %v735 = vpop.f32.mrf.mxu0
        %v736 = vpop.f32.mrf.mxu0
        %v737 = vadd.f32 0.0, %v736
        %v738 = vpop.f32.mrf.mxu0
        %739 = vmatprep.mubr.bf16.mxu0 0
        %740 = vmatmul.mubr.bf16.gmra.mxu0 %v581
        %v741 = vpop.f32.mrf.mxu0
        %v742 = vadd.f32 0.0, %v741
        %v743 = vpop.f32.mrf.mxu0
        %v744 = vpop.f32.mrf.mxu0
        %v745 = vadd.f32 0.0, %v744
        %v746 = vpop.f32.mrf.mxu0
        %747 = vmatprep.mubr.bf16.mxu0 0
        %748 = vmatmul.mubr.bf16.gmra.mxu0 %v582
        %v749 = vpop.f32.mrf.mxu0
        %v750 = vadd.f32 0.0, %v749
        %v751 = vpop.f32.mrf.mxu0
        %v752 = vpop.f32.mrf.mxu0
        %v753 = vadd.f32 0.0, %v752
        %v754 = vpop.f32.mrf.mxu0
        %755 = vmatprep.mubr.bf16.mxu0 0
        %756 = vmatmul.mubr.bf16.gmra.mxu0 %v583
        %v757 = vpop.f32.mrf.mxu0
        %v758 = vadd.f32 0.0, %v757
        %v759 = vpop.f32.mrf.mxu0
        %v760 = vpop.f32.mrf.mxu0
        %v761 = vadd.f32 0.0, %v760
        %v762 = vpop.f32.mrf.mxu0
        %763 = vmatprep.mubr.bf16.mxu0 0
        %764 = vmatmul.mubr.bf16.gmra.mxu0 %v584
        %v765 = vpop.f32.mrf.mxu0
        %v766 = vadd.f32 0.0, %v765
        %v767 = vpop.f32.mrf.mxu0
        %v768 = vpop.f32.mrf.mxu0
        %v769 = vadd.f32 0.0, %v768
        %v770 = vpop.f32.mrf.mxu0
        %771 = vmatprep.mubr.bf16.mxu0 0
        %772 = vmatmul.mubr.bf16.gmra.mxu0 %v585
        %v773 = vpop.f32.mrf.mxu0
        %v774 = vadd.f32 0.0, %v773
        %v775 = vpop.f32.mrf.mxu0
        %v776 = vpop.f32.mrf.mxu0
        %v777 = vadd.f32 0.0, %v776
        %v778 = vpop.f32.mrf.mxu0
        %779 = vmatprep.mubr.bf16.mxu0 0
        %780 = vmatmul.mubr.bf16.gmra.mxu0 %v586
        %v781 = vpop.f32.mrf.mxu0
        %v782 = vadd.f32 0.0, %v781
        %v783 = vpop.f32.mrf.mxu0
        %v784 = vpop.f32.mrf.mxu0
        %v785 = vadd.f32 0.0, %v784
        %v786 = vpop.f32.mrf.mxu0
        %787 = vmatprep.mubr.bf16.mxu0 0
        %788 = vmatmul.mubr.bf16.gmra.mxu0 %v587
        %v789 = vpop.f32.mrf.mxu0
        %v790 = vadd.f32 0.0, %v789
        %v791 = vpop.f32.mrf.mxu0
        %v792 = vpop.f32.mrf.mxu0
        %v793 = vadd.f32 0.0, %v792
        %v794 = vpop.f32.mrf.mxu0
        %795 = vmatprep.mubr.bf16.mxu0 0
        %796 = vmatmul.mubr.bf16.gmra.mxu0 %v588
        %v797 = vpop.f32.mrf.mxu0
        %v798 = vadd.f32 0.0, %v797
        %v799 = vpop.f32.mrf.mxu0
        %v800 = vpop.f32.mrf.mxu0
        %v801 = vadd.f32 0.0, %v800
        %v802 = vpop.f32.mrf.mxu0
        %803 = vmatprep.mubr.bf16.mxu0 0
        %804 = vmatmul.mubr.bf16.gmra.mxu0 %v589
        %v805 = vpop.f32.mrf.mxu0
        %v806 = vadd.f32 0.0, %v805
        %v807 = vpop.f32.mrf.mxu0
        %v808 = vpop.f32.mrf.mxu0
        %v809 = vadd.f32 0.0, %v808
        %v810 = vpop.f32.mrf.mxu0
        %811 = vmatprep.mubr.bf16.mxu0 0
        %812 = vmatmul.mubr.bf16.gmra.mxu0 %v590
        %v813 = vpop.f32.mrf.mxu0
        %v814 = vadd.f32 0.0, %v813
        %v815 = vpop.f32.mrf.mxu0
        %v816 = vpop.f32.mrf.mxu0
        %v817 = vadd.f32 0.0, %v816
        %v818 = vpop.f32.mrf.mxu0
        %819 = vmatprep.mubr.bf16.mxu0 0
        %820 = vmatmul.mubr.bf16.gmra.mxu0 %v591
        %v821 = vpop.f32.mrf.mxu0
        %v822 = vadd.f32 0.0, %v821
        %v823 = vpop.f32.mrf.mxu0
        %v824 = vpop.f32.mrf.mxu0
        %v825 = vadd.f32 0.0, %v824
        %v826 = vpop.f32.mrf.mxu0
        %827 = vmatprep.mubr.bf16.mxu0 0
        %828 = vmatmul.mubr.bf16.gmra.mxu0 %v592
        %v829 = vpop.f32.mrf.mxu0
        %v830 = vadd.f32 0.0, %v829
        %v831 = vpop.f32.mrf.mxu0
        %v832 = vpop.f32.mrf.mxu0
        %v833 = vadd.f32 0.0, %v832
        %v834 = vpop.f32.mrf.mxu0
        %835 = vmatprep.mubr.bf16.mxu0 0
        %836 = vmatmul.mubr.bf16.gmra.mxu0 %v593
        %v837 = vpop.f32.mrf.mxu0
        %v838 = vadd.f32 0.0, %v837
        %v839 = vpop.f32.mrf.mxu0
        %v840 = vpop.f32.mrf.mxu0
        %v841 = vadd.f32 0.0, %v840
        %v842 = vpop.f32.mrf.mxu0
        %843 = vmatprep.mubr.bf16.mxu0 0
        %844 = vmatmul.mubr.bf16.gmra.mxu0 %v594
        %v845 = vpop.f32.mrf.mxu0
        %v846 = vadd.f32 0.0, %v845
        %v847 = vpop.f32.mrf.mxu0
        %v848 = vpop.f32.mrf.mxu0
        %v849 = vadd.f32 0.0, %v848
        %v850 = vpop.f32.mrf.mxu0
        %851 = vmatprep.mubr.bf16.mxu0 0
        %852 = vmatmul.mubr.bf16.gmra.mxu0 %v595
        %v853 = vpop.f32.mrf.mxu0
        %v854 = vadd.f32 0.0, %v853
        %v855 = vpop.f32.mrf.mxu0
        %v856 = vpop.f32.mrf.mxu0
        %v857 = vadd.f32 0.0, %v856
        %v858 = vpop.f32.mrf.mxu0
        %859 = vmatprep.mubr.bf16.mxu0 0
        %860 = vmatmul.mubr.bf16.gmra.mxu0 %v596
        %v861 = vpop.f32.mrf.mxu0
        %v862 = vadd.f32 0.0, %v861
        %v863 = vpop.f32.mrf.mxu0
        %v864 = vpop.f32.mrf.mxu0
        %v865 = vadd.f32 0.0, %v864
        %v866 = vpop.f32.mrf.mxu0
        %867 = vmatprep.mubr.bf16.mxu0 0
        %868 = vmatmul.mubr.bf16.gmra.mxu0 %v597
        %v869 = vpop.f32.mrf.mxu0
        %v870 = vadd.f32 0.0, %v869
        %v871 = vpop.f32.mrf.mxu0
        %v872 = vpop.f32.mrf.mxu0
        %v873 = vadd.f32 0.0, %v872
        %v874 = vpop.f32.mrf.mxu0
        %875 = vmatprep.mubr.bf16.mxu0 0
        %876 = vmatmul.mubr.bf16.gmra.mxu0 %v598
        %v877 = vpop.f32.mrf.mxu0
        %v878 = vadd.f32 0.0, %v877
        %v879 = vpop.f32.mrf.mxu0
        %v880 = vpop.f32.mrf.mxu0
        %v881 = vadd.f32 0.0, %v880
        %v882 = vpop.f32.mrf.mxu0
        %883 = vmatprep.mubr.bf16.mxu0 0
        %884 = vmatmul.mubr.bf16.gmra.mxu0 %v599
        %v885 = vpop.f32.mrf.mxu0
        %v886 = vadd.f32 0.0, %v885
        %v887 = vpop.f32.mrf.mxu0
        %v888 = vpop.f32.mrf.mxu0
        %v889 = vadd.f32 0.0, %v888
        %v890 = vpop.f32.mrf.mxu0
        %891 = vmatprep.mubr.bf16.mxu0 0
        %892 = vmatmul.mubr.bf16.gmra.mxu0 %v600
        %v893 = vpop.f32.mrf.mxu0
        %v894 = vadd.f32 0.0, %v893
        %v895 = vpop.f32.mrf.mxu0
        %v896 = vpop.f32.mrf.mxu0
        %v897 = vadd.f32 0.0, %v896
        %v898 = vpop.f32.mrf.mxu0
        %899 = vmatprep.mubr.bf16.mxu0 0
        %900 = vmatmul.mubr.bf16.gmra.mxu0 %v601
        %v901 = vpop.f32.mrf.mxu0
        %v902 = vadd.f32 0.0, %v901
        %v903 = vpop.f32.mrf.mxu0
        %v904 = vpop.f32.mrf.mxu0
        %v905 = vadd.f32 0.0, %v904
        %v906 = vpop.f32.mrf.mxu0
        %907 = vmatprep.mubr.bf16.mxu0 0
        %908 = vmatmul.mubr.bf16.gmra.mxu0 %v602
        %v909 = vpop.f32.mrf.mxu0
        %v910 = vadd.f32 0.0, %v909
        %v911 = vpop.f32.mrf.mxu0
        %v912 = vpop.f32.mrf.mxu0
        %v913 = vadd.f32 0.0, %v912
        %v914 = vpop.f32.mrf.mxu0
        %915 = vmatprep.mubr.bf16.mxu0 0
        %916 = vmatmul.mubr.bf16.gmra.mxu0 %v603
        %v917 = vpop.f32.mrf.mxu0
        %v918 = vadd.f32 0.0, %v917
        %v919 = vpop.f32.mrf.mxu0
        %v920 = vpop.f32.mrf.mxu0
        %v921 = vadd.f32 0.0, %v920
        %v922 = vpop.f32.mrf.mxu0
        %923 = vmatprep.mubr.bf16.mxu0 0
        %924 = vmatmul.mubr.bf16.gmra.mxu0 %v604
        %v925 = vpop.f32.mrf.mxu0
        %v926 = vadd.f32 0.0, %v925
        %v927 = vpop.f32.mrf.mxu0
        %v928 = vpop.f32.mrf.mxu0
        %v929 = vadd.f32 0.0, %v928
        %v930 = vpop.f32.mrf.mxu0
        %931 = vmatprep.mubr.bf16.mxu0 0
        %932 = vmatmul.mubr.bf16.gmra.mxu0 %v605
        %v933 = vpop.f32.mrf.mxu0
        %v934 = vadd.f32 0.0, %v933
        %v935 = vpop.f32.mrf.mxu0
        %v936 = vpop.f32.mrf.mxu0
        %v937 = vadd.f32 0.0, %v936
        %v938 = vpop.f32.mrf.mxu0
        %939 = vmatprep.mubr.bf16.mxu0 0
        %940 = vmatmul.mubr.bf16.gmra.mxu0 %v606
        %v941 = vpop.f32.mrf.mxu0
        %v942 = vadd.f32 0.0, %v941
        %v943 = vpop.f32.mrf.mxu0
        %v944 = vpop.f32.mrf.mxu0
        %v945 = vadd.f32 0.0, %v944
        %v946 = vpop.f32.mrf.mxu0
        %947 = vmatprep.mubr.bf16.mxu0 0
        %948 = vmatmul.mubr.bf16.gmra.mxu0 %v607
        %v949 = vpop.f32.mrf.mxu0
        %v950 = vadd.f32 0.0, %v949
        %v951 = vpop.f32.mrf.mxu0
        %v952 = vpop.f32.mrf.mxu0
        %v953 = vadd.f32 0.0, %v952
        %v954 = vpop.f32.mrf.mxu0
        %955 = vmatprep.mubr.bf16.mxu0 0
        %956 = vmatmul.mubr.bf16.gmra.mxu0 %v608
        %v957 = vpop.f32.mrf.mxu0
        %v958 = vadd.f32 0.0, %v957
        %v959 = vpop.f32.mrf.mxu0
        %v960 = vpop.f32.mrf.mxu0
        %v961 = vadd.f32 0.0, %v960
        %v962 = vpop.f32.mrf.mxu0
        %963 = vmatprep.mubr.bf16.mxu0 0
        %964 = vmatmul.mubr.bf16.gmra.mxu0 %v609
        %v965 = vpop.f32.mrf.mxu0
        %v966 = vadd.f32 0.0, %v965
        %v967 = vpop.f32.mrf.mxu0
        %v968 = vpop.f32.mrf.mxu0
        %v969 = vadd.f32 0.0, %v968
        %v970 = vpop.f32.mrf.mxu0
        %971 = vmatprep.mubr.bf16.mxu0 0
        %972 = vmatmul.mubr.bf16.gmra.mxu0 %v610
        %v973 = vpop.f32.mrf.mxu0
        %v974 = vadd.f32 0.0, %v973
        %v975 = vpop.f32.mrf.mxu0
        %v976 = vpop.f32.mrf.mxu0
        %v977 = vadd.f32 0.0, %v976
        %v978 = vpop.f32.mrf.mxu0
        %979 = vdwg.mxu0
        %v980 = vadd.f32 %v307, %v726
        %v981 = vadd.f32 %v308, %v729
        %v982 = vadd.f32 %v309, %v734
        %v983 = vadd.f32 %v310, %v737
        %v984 = vadd.f32 %v311, %v742
        %v985 = vadd.f32 %v312, %v745
        %v986 = vadd.f32 %v313, %v750
        %v987 = vadd.f32 %v314, %v753
        %v988 = vadd.f32 %v315, %v758
        %v989 = vadd.f32 %v316, %v761
        %v990 = vadd.f32 %v317, %v766
        %v991 = vadd.f32 %v318, %v769
        %v992 = vadd.f32 %v319, %v774
        %v993 = vadd.f32 %v320, %v777
        %v994 = vadd.f32 %v321, %v782
        %v995 = vadd.f32 %v322, %v785
        %v996 = vadd.f32 %v323, %v790
        %v997 = vadd.f32 %v324, %v793
        %v998 = vadd.f32 %v325, %v798
        %v999 = vadd.f32 %v326, %v801
        %v1000 = vadd.f32 %v327, %v806
        %v1001 = vadd.f32 %v328, %v809
        %v1002 = vadd.f32 %v329, %v814
        %v1003 = vadd.f32 %v330, %v817
        %v1004 = vadd.f32 %v331, %v822
        %v1005 = vadd.f32 %v332, %v825
        %v1006 = vadd.f32 %v333, %v830
        %v1007 = vadd.f32 %v334, %v833
        %v1008 = vadd.f32 %v335, %v838
        %v1009 = vadd.f32 %v336, %v841
        %v1010 = vadd.f32 %v337, %v846
        %v1011 = vadd.f32 %v338, %v849
        %v1012 = vadd.f32 %v339, %v854
        %v1013 = vadd.f32 %v340, %v857
        %v1014 = vadd.f32 %v341, %v862
        %v1015 = vadd.f32 %v342, %v865
        %v1016 = vadd.f32 %v343, %v870
        %v1017 = vadd.f32 %v344, %v873
        %v1018 = vadd.f32 %v345, %v878
        %v1019 = vadd.f32 %v346, %v881
        %v1020 = vadd.f32 %v347, %v886
        %v1021 = vadd.f32 %v348, %v889
        %v1022 = vadd.f32 %v349, %v894
        %v1023 = vadd.f32 %v350, %v897
        %v1024 = vadd.f32 %v351, %v902
        %v1025 = vadd.f32 %v352, %v905
        %v1026 = vadd.f32 %v353, %v910
        %v1027 = vadd.f32 %v354, %v913
        %v1028 = vadd.f32 %v355, %v918
        %v1029 = vadd.f32 %v356, %v921
        %v1030 = vadd.f32 %v357, %v926
        %v1031 = vadd.f32 %v358, %v929
        %v1032 = vadd.f32 %v359, %v934
        %v1033 = vadd.f32 %v360, %v937
        %v1034 = vadd.f32 %v361, %v942
        %v1035 = vadd.f32 %v362, %v945
        %v1036 = vadd.f32 %v363, %v950
        %v1037 = vadd.f32 %v364, %v953
        %v1038 = vadd.f32 %v365, %v958
        %v1039 = vadd.f32 %v366, %v961
        %v1040 = vadd.f32 %v367, %v966
        %v1041 = vadd.f32 %v368, %v969
        %v1042 = vadd.f32 %v369, %v974
        %v1043 = vadd.f32 %v370, %v977
        %1044 = vst [vmem:[#allocation2] sm:$0xff] %v980
        %1045 = vst [vmem:[#allocation2 + $0x8] sm:$0xff] %v981
        %1046 = vst [vmem:[#allocation2 + $0x10] sm:$0xff] %v982
        %1047 = vst [vmem:[#allocation2 + $0x18] sm:$0xff] %v983
        %1048 = vst [vmem:[#allocation2 + $0x20] sm:$0xff] %v984
        %1049 = vst [vmem:[#allocation2 + $0x28] sm:$0xff] %v985
        %1050 = vst [vmem:[#allocation2 + $0x30] sm:$0xff] %v986
        %1051 = vst [vmem:[#allocation2 + $0x38] sm:$0xff] %v987
        %1052 = vst [vmem:[#allocation2 + $0x40] sm:$0xff] %v988
        %1053 = vst [vmem:[#allocation2 + $0x48] sm:$0xff] %v989
        %1054 = vst [vmem:[#allocation2 + $0x50] sm:$0xff] %v990
        %1055 = vst [vmem:[#allocation2 + $0x58] sm:$0xff] %v991
        %1056 = vst [vmem:[#allocation2 + $0x60] sm:$0xff] %v992
        %1057 = vst [vmem:[#allocation2 + $0x68] sm:$0xff] %v993
        %1058 = vst [vmem:[#allocation2 + $0x70] sm:$0xff] %v994
        %1059 = vst [vmem:[#allocation2 + $0x78] sm:$0xff] %v995
        %1060 = vst [vmem:[#allocation2 + $0x80] sm:$0xff] %v996
        %1061 = vst [vmem:[#allocation2 + $0x88] sm:$0xff] %v997
        %1062 = vst [vmem:[#allocation2 + $0x90] sm:$0xff] %v998
        %1063 = vst [vmem:[#allocation2 + $0x98] sm:$0xff] %v999
        %1064 = vst [vmem:[#allocation2 + $0xa0] sm:$0xff] %v1000
        %1065 = vst [vmem:[#allocation2 + $0xa8] sm:$0xff] %v1001
        %1066 = vst [vmem:[#allocation2 + $0xb0] sm:$0xff] %v1002
        %1067 = vst [vmem:[#allocation2 + $0xb8] sm:$0xff] %v1003
        %1068 = vst [vmem:[#allocation2 + $0xc0] sm:$0xff] %v1004
        %1069 = vst [vmem:[#allocation2 + $0xc8] sm:$0xff] %v1005
        %1070 = vst [vmem:[#allocation2 + $0xd0] sm:$0xff] %v1006
        %1071 = vst [vmem:[#allocation2 + $0xd8] sm:$0xff] %v1007
        %1072 = vst [vmem:[#allocation2 + $0xe0] sm:$0xff] %v1008
        %1073 = vst [vmem:[#allocation2 + $0xe8] sm:$0xff] %v1009
        %1074 = vst [vmem:[#allocation2 + $0xf0] sm:$0xff] %v1010
        %1075 = vst [vmem:[#allocation2 + $0xf8] sm:$0xff] %v1011
        %1076 = vst [vmem:[#allocation2 + $0x100] sm:$0xff] %v1012
        %1077 = vst [vmem:[#allocation2 + $0x108] sm:$0xff] %v1013
        %1078 = vst [vmem:[#allocation2 + $0x110] sm:$0xff] %v1014
        %1079 = vst [vmem:[#allocation2 + $0x118] sm:$0xff] %v1015
        %1080 = vst [vmem:[#allocation2 + $0x120] sm:$0xff] %v1016
        %1081 = vst [vmem:[#allocation2 + $0x128] sm:$0xff] %v1017
        %1082 = vst [vmem:[#allocation2 + $0x130] sm:$0xff] %v1018
        %1083 = vst [vmem:[#allocation2 + $0x138] sm:$0xff] %v1019
        %1084 = vst [vmem:[#allocation2 + $0x140] sm:$0xff] %v1020
        %1085 = vst [vmem:[#allocation2 + $0x148] sm:$0xff] %v1021
        %1086 = vst [vmem:[#allocation2 + $0x150] sm:$0xff] %v1022
        %1087 = vst [vmem:[#allocation2 + $0x158] sm:$0xff] %v1023
        %1088 = vst [vmem:[#allocation2 + $0x160] sm:$0xff] %v1024
        %1089 = vst [vmem:[#allocation2 + $0x168] sm:$0xff] %v1025
        %1090 = vst [vmem:[#allocation2 + $0x170] sm:$0xff] %v1026
        %1091 = vst [vmem:[#allocation2 + $0x178] sm:$0xff] %v1027
        %1092 = vst [vmem:[#allocation2 + $0x180] sm:$0xff] %v1028
        %1093 = vst [vmem:[#allocation2 + $0x188] sm:$0xff] %v1029
        %1094 = vst [vmem:[#allocation2 + $0x190] sm:$0xff] %v1030
        %1095 = vst [vmem:[#allocation2 + $0x198] sm:$0xff] %v1031
        %1096 = vst [vmem:[#allocation2 + $0x1a0] sm:$0xff] %v1032
        %1097 = vst [vmem:[#allocation2 + $0x1a8] sm:$0xff] %v1033
        %1098 = vst [vmem:[#allocation2 + $0x1b0] sm:$0xff] %v1034
        %1099 = vst [vmem:[#allocation2 + $0x1b8] sm:$0xff] %v1035
        %1100 = vst [vmem:[#allocation2 + $0x1c0] sm:$0xff] %v1036
        %1101 = vst [vmem:[#allocation2 + $0x1c8] sm:$0xff] %v1037
        %1102 = vst [vmem:[#allocation2 + $0x1d0] sm:$0xff] %v1038
        %1103 = vst [vmem:[#allocation2 + $0x1d8] sm:$0xff] %v1039
        %1104 = vst [vmem:[#allocation2 + $0x1e0] sm:$0xff] %v1040
        %1105 = vst [vmem:[#allocation2 + $0x1e8] sm:$0xff] %v1041
        %1106 = vst [vmem:[#allocation2 + $0x1f0] sm:$0xff] %v1042
        %1107 = vst [vmem:[#allocation2 + $0x1f8] sm:$0xff] %v1043
        // Predicated region
        $region41: #{tpu_custom_call.1} parent=27 // pred_check
          %p1108 = pneg %p239
        $region42: #{tpu_custom_call.1} parent=27 // pred_check_branch
          %1110 = sbr.rel (%p1108) target = $region44
        $region43: #{tpu_custom_call.1} parent=27 // pred_region
          %v1111 = vld [vmem:[#allocation2] sm:$0xff]
          %v1112 = vld [vmem:[#allocation2 + $0x8] sm:$0xff]
          %v1113 = vld [vmem:[#allocation2 + $0x10] sm:$0xff]
          %v1114 = vld [vmem:[#allocation2 + $0x18] sm:$0xff]
          %v1115 = vld [vmem:[#allocation2 + $0x20] sm:$0xff]
          %v1116 = vld [vmem:[#allocation2 + $0x28] sm:$0xff]
          %v1117 = vld [vmem:[#allocation2 + $0x30] sm:$0xff]
          %v1118 = vld [vmem:[#allocation2 + $0x38] sm:$0xff]
          %v1119 = vld [vmem:[#allocation2 + $0x40] sm:$0xff]
          %v1120 = vld [vmem:[#allocation2 + $0x48] sm:$0xff]
          %v1121 = vld [vmem:[#allocation2 + $0x50] sm:$0xff]
          %v1122 = vld [vmem:[#allocation2 + $0x58] sm:$0xff]
          %v1123 = vld [vmem:[#allocation2 + $0x60] sm:$0xff]
          %v1124 = vld [vmem:[#allocation2 + $0x68] sm:$0xff]
          %v1125 = vld [vmem:[#allocation2 + $0x70] sm:$0xff]
          %v1126 = vld [vmem:[#allocation2 + $0x78] sm:$0xff]
          %v1127 = vld [vmem:[#allocation2 + $0x80] sm:$0xff]
          %v1128 = vld [vmem:[#allocation2 + $0x88] sm:$0xff]
          %v1129 = vld [vmem:[#allocation2 + $0x90] sm:$0xff]
          %v1130 = vld [vmem:[#allocation2 + $0x98] sm:$0xff]
          %v1131 = vld [vmem:[#allocation2 + $0xa0] sm:$0xff]
          %v1132 = vld [vmem:[#allocation2 + $0xa8] sm:$0xff]
          %v1133 = vld [vmem:[#allocation2 + $0xb0] sm:$0xff]
          %v1134 = vld [vmem:[#allocation2 + $0xb8] sm:$0xff]
          %v1135 = vld [vmem:[#allocation2 + $0xc0] sm:$0xff]
          %v1136 = vld [vmem:[#allocation2 + $0xc8] sm:$0xff]
          %v1137 = vld [vmem:[#allocation2 + $0xd0] sm:$0xff]
          %v1138 = vld [vmem:[#allocation2 + $0xd8] sm:$0xff]
          %v1139 = vld [vmem:[#allocation2 + $0xe0] sm:$0xff]
          %v1140 = vld [vmem:[#allocation2 + $0xe8] sm:$0xff]
          %v1141 = vld [vmem:[#allocation2 + $0xf0] sm:$0xff]
          %v1142 = vld [vmem:[#allocation2 + $0xf8] sm:$0xff]
          %v1143 = vld [vmem:[#allocation2 + $0x100] sm:$0xff]
          %v1144 = vld [vmem:[#allocation2 + $0x108] sm:$0xff]
          %v1145 = vld [vmem:[#allocation2 + $0x110] sm:$0xff]
          %v1146 = vld [vmem:[#allocation2 + $0x118] sm:$0xff]
          %v1147 = vld [vmem:[#allocation2 + $0x120] sm:$0xff]
          %v1148 = vld [vmem:[#allocation2 + $0x128] sm:$0xff]
          %v1149 = vld [vmem:[#allocation2 + $0x130] sm:$0xff]
          %v1150 = vld [vmem:[#allocation2 + $0x138] sm:$0xff]
          %v1151 = vld [vmem:[#allocation2 + $0x140] sm:$0xff]
          %v1152 = vld [vmem:[#allocation2 + $0x148] sm:$0xff]
          %v1153 = vld [vmem:[#allocation2 + $0x150] sm:$0xff]
          %v1154 = vld [vmem:[#allocation2 + $0x158] sm:$0xff]
          %v1155 = vld [vmem:[#allocation2 + $0x160] sm:$0xff]
          %v1156 = vld [vmem:[#allocation2 + $0x168] sm:$0xff]
          %v1157 = vld [vmem:[#allocation2 + $0x170] sm:$0xff]
          %v1158 = vld [vmem:[#allocation2 + $0x178] sm:$0xff]
          %v1159 = vld [vmem:[#allocation2 + $0x180] sm:$0xff]
          %v1160 = vld [vmem:[#allocation2 + $0x188] sm:$0xff]
          %v1161 = vld [vmem:[#allocation2 + $0x190] sm:$0xff]
          %v1162 = vld [vmem:[#allocation2 + $0x198] sm:$0xff]
          %v1163 = vld [vmem:[#allocation2 + $0x1a0] sm:$0xff]
          %v1164 = vld [vmem:[#allocation2 + $0x1a8] sm:$0xff]
          %v1165 = vld [vmem:[#allocation2 + $0x1b0] sm:$0xff]
          %v1166 = vld [vmem:[#allocation2 + $0x1b8] sm:$0xff]
          %v1167 = vld [vmem:[#allocation2 + $0x1c0] sm:$0xff]
          %v1168 = vld [vmem:[#allocation2 + $0x1c8] sm:$0xff]
          %v1169 = vld [vmem:[#allocation2 + $0x1d0] sm:$0xff]
          %v1170 = vld [vmem:[#allocation2 + $0x1d8] sm:$0xff]
          %v1171 = vld [vmem:[#allocation2 + $0x1e0] sm:$0xff]
          %v1172 = vld [vmem:[#allocation2 + $0x1e8] sm:$0xff]
          %v1173 = vld [vmem:[#allocation2 + $0x1f0] sm:$0xff]
          %v1174 = vld [vmem:[#allocation2 + $0x1f8] sm:$0xff]
          %v1175 = vadd.f32 %v1111, %v1112
          %v1176 = vadd.f32 %v1175, %v1113
          %v1177 = vadd.f32 %v1176, %v1114
          %v1178 = vadd.f32 %v1177, %v1115
          %v1179 = vadd.f32 %v1178, %v1116
          %v1180 = vadd.f32 %v1179, %v1117
          %v1181 = vadd.f32 %v1180, %v1118
          %v1182 = vadd.f32 %v1181, %v1119
          %v1183 = vadd.f32 %v1182, %v1120
          %v1184 = vadd.f32 %v1183, %v1121
          %v1185 = vadd.f32 %v1184, %v1122
          %v1186 = vadd.f32 %v1185, %v1123
          %v1187 = vadd.f32 %v1186, %v1124
          %v1188 = vadd.f32 %v1187, %v1125
          %v1189 = vadd.f32 %v1188, %v1126
          %v1190 = vadd.f32 %v1189, %v1127
          %v1191 = vadd.f32 %v1190, %v1128
          %v1192 = vadd.f32 %v1191, %v1129
          %v1193 = vadd.f32 %v1192, %v1130
          %v1194 = vadd.f32 %v1193, %v1131
          %v1195 = vadd.f32 %v1194, %v1132
          %v1196 = vadd.f32 %v1195, %v1133
          %v1197 = vadd.f32 %v1196, %v1134
          %v1198 = vadd.f32 %v1197, %v1135
          %v1199 = vadd.f32 %v1198, %v1136
          %v1200 = vadd.f32 %v1199, %v1137
          %v1201 = vadd.f32 %v1200, %v1138
          %v1202 = vadd.f32 %v1201, %v1139
          %v1203 = vadd.f32 %v1202, %v1140
          %v1204 = vadd.f32 %v1203, %v1141
          %v1205 = vadd.f32 %v1204, %v1142
          %v1206 = vadd.f32 %v1205, %v1143
          %v1207 = vadd.f32 %v1206, %v1144
          %v1208 = vadd.f32 %v1207, %v1145
          %v1209 = vadd.f32 %v1208, %v1146
          %v1210 = vadd.f32 %v1209, %v1147
          %v1211 = vadd.f32 %v1210, %v1148
          %v1212 = vadd.f32 %v1211, %v1149
          %v1213 = vadd.f32 %v1212, %v1150
          %v1214 = vadd.f32 %v1213, %v1151
          %v1215 = vadd.f32 %v1214, %v1152
          %v1216 = vadd.f32 %v1215, %v1153
          %v1217 = vadd.f32 %v1216, %v1154
          %v1218 = vadd.f32 %v1217, %v1155
          %v1219 = vadd.f32 %v1218, %v1156
          %v1220 = vadd.f32 %v1219, %v1157
          %v1221 = vadd.f32 %v1220, %v1158
          %v1222 = vadd.f32 %v1221, %v1159
          %v1223 = vadd.f32 %v1222, %v1160
          %v1224 = vadd.f32 %v1223, %v1161
          %v1225 = vadd.f32 %v1224, %v1162
          %v1226 = vadd.f32 %v1225, %v1163
          %v1227 = vadd.f32 %v1226, %v1164
          %v1228 = vadd.f32 %v1227, %v1165
          %v1229 = vadd.f32 %v1228, %v1166
          %v1230 = vadd.f32 %v1229, %v1167
          %v1231 = vadd.f32 %v1230, %v1168
          %v1232 = vadd.f32 %v1231, %v1169
          %v1233 = vadd.f32 %v1232, %v1170
          %v1234 = vadd.f32 %v1233, %v1171
          %v1235 = vadd.f32 %v1234, %v1172
          %v1236 = vadd.f32 %v1235, %v1173
          %v1237 = vadd.f32 %v1236, %v1174
          %v1238 = vrot.slane %v1237, 4
          %v1239 = vadd.f32 %v1237, %v1238
          %v1240 = vrot.slane %v1239, 2
          %v1241 = vadd.f32 %v1239, %v1240
          %v1242 = vrot.slane %v1241, 1
          %v1243 = vadd.f32 %v1241, %v1242
          %1244 = vst [vmem:[%s229] sm:$0x1] %v1243
          %v1245 = vmul.f32 %v1111, %v1111
          %v1246 = vmul.f32 %v1112, %v1112
          %v1247 = vmul.f32 %v1113, %v1113
          %v1248 = vmul.f32 %v1114, %v1114
          %v1249 = vmul.f32 %v1115, %v1115
          %v1250 = vmul.f32 %v1116, %v1116
          %v1251 = vmul.f32 %v1117, %v1117
          %v1252 = vmul.f32 %v1118, %v1118
          %v1253 = vmul.f32 %v1119, %v1119
          %v1254 = vmul.f32 %v1120, %v1120
          %v1255 = vmul.f32 %v1121, %v1121
          %v1256 = vmul.f32 %v1122, %v1122
          %v1257 = vmul.f32 %v1123, %v1123
          %v1258 = vmul.f32 %v1124, %v1124
          %v1259 = vmul.f32 %v1125, %v1125
          %v1260 = vmul.f32 %v1126, %v1126
          %v1261 = vmul.f32 %v1127, %v1127
          %v1262 = vmul.f32 %v1128, %v1128
          %v1263 = vmul.f32 %v1129, %v1129
          %v1264 = vmul.f32 %v1130, %v1130
          %v1265 = vmul.f32 %v1131, %v1131
          %v1266 = vmul.f32 %v1132, %v1132
          %v1267 = vmul.f32 %v1133, %v1133
          %v1268 = vmul.f32 %v1134, %v1134
          %v1269 = vmul.f32 %v1135, %v1135
          %v1270 = vmul.f32 %v1136, %v1136
          %v1271 = vmul.f32 %v1137, %v1137
          %v1272 = vmul.f32 %v1138, %v1138
          %v1273 = vmul.f32 %v1139, %v1139
          %v1274 = vmul.f32 %v1140, %v1140
          %v1275 = vmul.f32 %v1141, %v1141
          %v1276 = vmul.f32 %v1142, %v1142
          %v1277 = vmul.f32 %v1143, %v1143
          %v1278 = vmul.f32 %v1144, %v1144
          %v1279 = vmul.f32 %v1145, %v1145
          %v1280 = vmul.f32 %v1146, %v1146
          %v1281 = vmul.f32 %v1147, %v1147
          %v1282 = vmul.f32 %v1148, %v1148
          %v1283 = vmul.f32 %v1149, %v1149
          %v1284 = vmul.f32 %v1150, %v1150
          %v1285 = vmul.f32 %v1151, %v1151
          %v1286 = vmul.f32 %v1152, %v1152
          %v1287 = vmul.f32 %v1153, %v1153
          %v1288 = vmul.f32 %v1154, %v1154
          %v1289 = vmul.f32 %v1155, %v1155
          %v1290 = vmul.f32 %v1156, %v1156
          %v1291 = vmul.f32 %v1157, %v1157
          %v1292 = vmul.f32 %v1158, %v1158
          %v1293 = vmul.f32 %v1159, %v1159
          %v1294 = vmul.f32 %v1160, %v1160
          %v1295 = vmul.f32 %v1161, %v1161
          %v1296 = vmul.f32 %v1162, %v1162
          %v1297 = vmul.f32 %v1163, %v1163
          %v1298 = vmul.f32 %v1164, %v1164
          %v1299 = vmul.f32 %v1165, %v1165
          %v1300 = vmul.f32 %v1166, %v1166
          %v1301 = vmul.f32 %v1167, %v1167
          %v1302 = vmul.f32 %v1168, %v1168
          %v1303 = vmul.f32 %v1169, %v1169
          %v1304 = vmul.f32 %v1170, %v1170
          %v1305 = vmul.f32 %v1171, %v1171
          %v1306 = vmul.f32 %v1172, %v1172
          %v1307 = vmul.f32 %v1173, %v1173
          %v1308 = vmul.f32 %v1174, %v1174
          %v1309 = vadd.f32 %v1245, %v1246
          %v1310 = vadd.f32 %v1309, %v1247
          %v1311 = vadd.f32 %v1310, %v1248
          %v1312 = vadd.f32 %v1311, %v1249
          %v1313 = vadd.f32 %v1312, %v1250
          %v1314 = vadd.f32 %v1313, %v1251
          %v1315 = vadd.f32 %v1314, %v1252
          %v1316 = vadd.f32 %v1315, %v1253
          %v1317 = vadd.f32 %v1316, %v1254
          %v1318 = vadd.f32 %v1317, %v1255
          %v1319 = vadd.f32 %v1318, %v1256
          %v1320 = vadd.f32 %v1319, %v1257
          %v1321 = vadd.f32 %v1320, %v1258
          %v1322 = vadd.f32 %v1321, %v1259
          %v1323 = vadd.f32 %v1322, %v1260
          %v1324 = vadd.f32 %v1323, %v1261
          %v1325 = vadd.f32 %v1324, %v1262
          %v1326 = vadd.f32 %v1325, %v1263
          %v1327 = vadd.f32 %v1326, %v1264
          %v1328 = vadd.f32 %v1327, %v1265
          %v1329 = vadd.f32 %v1328, %v1266
          %v1330 = vadd.f32 %v1329, %v1267
          %v1331 = vadd.f32 %v1330, %v1268
          %v1332 = vadd.f32 %v1331, %v1269
          %v1333 = vadd.f32 %v1332, %v1270
          %v1334 = vadd.f32 %v1333, %v1271
          %v1335 = vadd.f32 %v1334, %v1272
          %v1336 = vadd.f32 %v1335, %v1273
          %v1337 = vadd.f32 %v1336, %v1274
          %v1338 = vadd.f32 %v1337, %v1275
          %v1339 = vadd.f32 %v1338, %v1276
          %v1340 = vadd.f32 %v1339, %v1277
          %v1341 = vadd.f32 %v1340, %v1278
          %v1342 = vadd.f32 %v1341, %v1279
          %v1343 = vadd.f32 %v1342, %v1280
          %v1344 = vadd.f32 %v1343, %v1281
          %v1345 = vadd.f32 %v1344, %v1282
          %v1346 = vadd.f32 %v1345, %v1283
          %v1347 = vadd.f32 %v1346, %v1284
          %v1348 = vadd.f32 %v1347, %v1285
          %v1349 = vadd.f32 %v1348, %v1286
          %v1350 = vadd.f32 %v1349, %v1287
          %v1351 = vadd.f32 %v1350, %v1288
          %v1352 = vadd.f32 %v1351, %v1289
          %v1353 = vadd.f32 %v1352, %v1290
          %v1354 = vadd.f32 %v1353, %v1291
          %v1355 = vadd.f32 %v1354, %v1292
          %v1356 = vadd.f32 %v1355, %v1293
          %v1357 = vadd.f32 %v1356, %v1294
          %v1358 = vadd.f32 %v1357, %v1295
          %v1359 = vadd.f32 %v1358, %v1296
          %v1360 = vadd.f32 %v1359, %v1297
          %v1361 = vadd.f32 %v1360, %v1298
          %v1362 = vadd.f32 %v1361, %v1299
          %v1363 = vadd.f32 %v1362, %v1300
          %v1364 = vadd.f32 %v1363, %v1301
          %v1365 = vadd.f32 %v1364, %v1302
          %v1366 = vadd.f32 %v1365, %v1303
          %v1367 = vadd.f32 %v1366, %v1304
          %v1368 = vadd.f32 %v1367, %v1305
          %v1369 = vadd.f32 %v1368, %v1306
          %v1370 = vadd.f32 %v1369, %v1307
          %v1371 = vadd.f32 %v1370, %v1308
          %v1372 = vrot.slane %v1371, 4
          %v1373 = vadd.f32 %v1371, %v1372
          %v1374 = vrot.slane %v1373, 2
          %v1375 = vadd.f32 %v1373, %v1374
          %v1376 = vrot.slane %v1375, 1
          %v1377 = vadd.f32 %v1375, %v1376
          %1378 = vst [vmem:[%s235] sm:$0x1] %v1377
        $region44: #{tpu_custom_call.1} parent=27 // pred_fallthru
          _
        %s1379 = sand.u32 %s99, 1
        %s1380 = scalar_lea.sflag [#allocation5], %s1379
        %s1381 = sand.u32 %s99, 1
        %s1382 = scalar_lea.vmem [#allocation8], %s1381
        %s1383 = sand.u32 %s125, 1
        %s1384 = scalar_lea.sflag [#allocation10], %s1383
        %s1385 = sand.u32 %s125, 1
        %s1386 = scalar_lea.vmem [#allocation9], %s1385
        // Predicated region
        $region45: #{tpu_custom_call.1} parent=27 // pred_check
          %p1387 = pneg %p109
        $region46: #{tpu_custom_call.1} parent=27 // pred_check_branch
          %1389 = sbr.rel (%p1387) target = $region48
        $region47: #{tpu_custom_call.1} parent=27 // pred_region
          %s1391 = ssub.s32 16, 16
          %1392 = vsyncadd %s1380, %s1391
          %s1393 = smul.addr %s29, 16
          %s1394 = scalar_lea.hbm %s2, %s1393
          %s1396 = sshll.u32 %s1382, 4
          %s1397 = int_to_ptr.vmem [resolvable:$true] %s1396
          %1399 = dma.vmem_to_hbm [thread:$0]  %s1397, 16, %s1394, %s1380
        $region48: #{tpu_custom_call.1} parent=27 // pred_fallthru
          _
        // Predicated region
        $region49: #{tpu_custom_call.1} parent=27 // pred_check
          %p1400 = pneg %p135
        $region50: #{tpu_custom_call.1} parent=27 // pred_check_branch
          %1402 = sbr.rel (%p1400) target = $region52
        $region51: #{tpu_custom_call.1} parent=27 // pred_region
          %s1404 = ssub.s32 16, 16
          %1405 = vsyncadd %s1384, %s1404
          %s1406 = smul.addr %s29, 16
          %s1407 = scalar_lea.hbm %s3, %s1406
          %s1409 = sshll.u32 %s1386, 4
          %s1410 = int_to_ptr.vmem [resolvable:$true] %s1409
          %1412 = dma.vmem_to_hbm [thread:$0]  %s1410, 16, %s1407, %s1384
        $region52: #{tpu_custom_call.1} parent=27 // pred_fallthru
          _
      $region28: #{tpu_custom_call.1} parent=5 // pred_fallthru
        _
      %p1413 = scmp.le.s32.totalorder 2, %s20
      // Predicated region
      $region53: #{tpu_custom_call.1} parent=5 // pred_check
        %p1414 = pneg %p1413
      $region54: #{tpu_custom_call.1} parent=5 // pred_check_branch
        %1416 = sbr.rel (%p1414) target = $region56
      $region55: #{tpu_custom_call.1} parent=5 // pred_region
        %s1417 = ssub.s32 %s20, 2
        // Predicated region
        $region57: #{tpu_custom_call.1} parent=55 // pred_check
          %p1418 = pneg %p115
        $region58: #{tpu_custom_call.1} parent=55 // pred_check_branch
          %1420 = sbr.rel (%p1418) target = $region60
        $region59: #{tpu_custom_call.1} parent=55 // pred_region
          %s1421 = sand.u32 %s100, 1
          %s1422 = scalar_lea.sflag [#allocation5], %s1421
          %s1423 = sand.u32 %s100, 1
          %s1424 = scalar_lea.vmem [#allocation8], %s1423
          %1425 = dma.done %s1422, 16
        $region60: #{tpu_custom_call.1} parent=55 // pred_fallthru
          _
        // Predicated region
        $region61: #{tpu_custom_call.1} parent=55 // pred_check
          %p1426 = pneg %p141
        $region62: #{tpu_custom_call.1} parent=55 // pred_check_branch
          %1428 = sbr.rel (%p1426) target = $region64
        $region63: #{tpu_custom_call.1} parent=55 // pred_region
          %s1429 = sand.u32 %s126, 1
          %s1430 = scalar_lea.sflag [#allocation10], %s1429
          %s1431 = sand.u32 %s126, 1
          %s1432 = scalar_lea.vmem [#allocation9], %s1431
          %1433 = dma.done %s1430, 16
        $region64: #{tpu_custom_call.1} parent=55 // pred_fallthru
          _
      $region56: #{tpu_custom_call.1} parent=5 // pred_fallthru
        _
    $region6: #{tpu_custom_call.1} parent=1 // loop_footer
      %s24 = sadd.s32 1, %s20
    $region7: #{tpu_custom_call.1} parent=1 // loop_footer_branch
      %19 = sbr.rel target = $region3
    $region8: #{tpu_custom_call.1} parent=1 // loop_exit
      _
    %1434 = vsyncpa [#allocation4], 1
    %s1435 = scalar_lea.sflag [#allocation4], 1
    %1436 = vsyncpa %s1435, 1
    %1437 = vsyncpa [#allocation7], 1
    %1438 = vsyncpa [#allocation5], 1
    %s1439 = scalar_lea.sflag [#allocation5], 1
    %1440 = vsyncpa %s1439, 1
    %1441 = vsyncpa [#allocation10], 1
    %s1442 = scalar_lea.sflag [#allocation10], 1
    %1443 = vsyncpa %s1442, 1

</llo_original>
